<compile_context>
chip_gen: v7x
topology: tpu7x:2x2x1
jax: 0.10.0
libtpu: 0.0.40
codegen_flags: <defaults>
</compile_context>

<pallas_src>
import functools

import jax
import jax.numpy as jnp
from jax.experimental import pallas as pl
from jax.experimental.pallas import tpu as pltpu


def _feature_embedding_kernel(rows_ref, table_ref, out_ref, *, num_fields, vocab):
    # rows_ref:  VMEM (TB, F)    int32 -- absolute embedding-row ids
    # table_ref: VMEM (V,  D)    f32   -- full embedding table (resident)
    # out_ref:   VMEM (TB, F*D)  f32   -- lane-dense output block
    rows = rows_ref[...]                                    # (TB, F)
    table = table_ref[...]                                  # (V, D)
    tb = rows.shape[0]

    # (TB, V) column-id plane, reused for every field's one-hot compare.
    col_ids = jax.lax.broadcasted_iota(jnp.int32, (tb, vocab), 1)

    pieces = []
    for f in range(num_fields):                             # F is small & static
        onehot = (col_ids == rows[:, f : f + 1]).astype(table.dtype)  # (TB, V)
        # One MXU matmul per field; exactly one nonzero per output row, so
        # HIGHEST precision reproduces the gathered f32 values exactly.
        pieces.append(
            jnp.dot(
                onehot,
                table,
                preferred_element_type=jnp.float32,
                precision=jax.lax.Precision.HIGHEST,
            )
        )
    out_ref[...] = jnp.concatenate(pieces, axis=-1).astype(out_ref.dtype)


def feature_embedding(x, offsets, table, *, batch_tile=512):
    """x: (B, F) int32, offsets: (F,) int32, table: (V, D) f32 -> (B, F, D)."""
    B, F = x.shape
    V, D = table.shape

    # Fold the field offsets into absolute row ids with one fused XLA add.
    rows = x.astype(jnp.int32) + offsets[None, :].astype(jnp.int32)

    # Choose a batch tile and pad the batch to a multiple of it.
    if B <= batch_tile:
        TB = max(8, ((B + 7) // 8) * 8)        # small B: single grid step
    else:
        TB = batch_tile
    B_pad = ((B + TB - 1) // TB) * TB
    if B_pad != B:
        rows = jnp.pad(rows, ((0, B_pad - B), (0, 0)))  # pad rows -> gather row 0

    kernel = functools.partial(_feature_embedding_kernel, num_fields=F, vocab=V)

    cost = pl.CostEstimate(
        flops=2 * B_pad * F * V * D,                       # one-hot matmuls
        transcendentals=0,
        bytes_accessed=B_pad * F * D * 4 + V * D * 4 + B_pad * F * 4,
    )

    out_flat = pl.pallas_call(
        kernel,
        out_shape=jax.ShapeDtypeStruct((B_pad, F * D), table.dtype),
        grid_spec=pltpu.PrefetchScalarGridSpec(
            num_scalar_prefetch=0,
            grid=(B_pad // TB,),
            in_specs=[
                # per-tile absolute row ids
                pl.BlockSpec((TB, F), lambda i: (i, 0)),
                # full embedding table, resident in VMEM every step
                pl.BlockSpec((V, D), lambda i: (0, 0)),
            ],
            out_specs=pl.BlockSpec((TB, F * D), lambda i: (i, 0)),
        ),
        compiler_params=pltpu.CompilerParams(
            dimension_semantics=("parallel",),             # batch-parallel (v7x 2 TCs)
        ),
        cost_estimate=cost,
    )(rows, table)

    return out_flat[:B].reshape(B, F, D)


if __name__ == "__main__":
    # Module config (small, consistent with FeatureEmbedding.__init__)
    field_dims = [3, 5, 4, 6]          # sum = 18 rows in the embedding table
    embed_dim = 32
    B = 2
    F = len(field_dims)
    V = sum(field_dims)

    key = jax.random.PRNGKey(0)
    k_w, k_x = jax.random.split(key)

    # nn.Embedding weight ~ Normal(0, 0.01)
    table = (0.01 * jax.random.normal(k_w, (V, embed_dim))).astype(jnp.float32)

    # offsets = (0, cumsum(field_dims)[:-1])
    offsets = jnp.concatenate(
        [jnp.zeros((1,), jnp.int32), jnp.cumsum(jnp.array(field_dims, jnp.int32))[:-1]]
    )

    # per-field indices, each within its own field's cardinality
    maxvals = jnp.array(field_dims, jnp.int32)
    x = (jax.random.randint(k_x, (B, F), 0, 2**30) % maxvals[None, :]).astype(jnp.int32)

    out = feature_embedding(x, offsets, table)
    out = jax.block_until_ready(out)

    # reference: plain JAX gather
    ref = jnp.take(table, x + offsets[None, :], axis=0)
    assert out.shape == (B, F, embed_dim)
    assert jnp.allclose(out, ref, atol=1e-6, rtol=1e-6), "mismatch vs reference gather"

    print("KERNEL_OK")
</pallas_src>

<mosaic_0001>
module attributes {stable_mosaic.version = 11 : i64} {
  func.func @_feature_embedding_kernel(%arg0: i32, %arg1: memref<8x4xi32, #tpu.memory_space<vmem>>, %arg2: memref<18x32xf32, #tpu.memory_space<vmem>>, %arg3: memref<8x128xf32, #tpu.memory_space<vmem>>) attributes {dimension_semantics = [#tpu.dimension_semantics<parallel>], iteration_bounds = array<i64: 1>, scalar_prefetch = 0 : i64, scratch_operands = 0 : i64, tpu.core_type = #tpu.core_type<tc>, window_params = [{transform_indices = @transform_0, window_bounds = array<i64: 8, 4>}, {pipeline_mode = #tpu.pipeline_mode<synchronous>, transform_indices = @transform_1, window_bounds = array<i64: 18, 32>}, {transform_indices = @transform_2, window_bounds = array<i64: 8, 128>}]} {
    %c0 = arith.constant 0 : index
    %c0_0 = arith.constant 0 : index
    %0 = vector.load %arg1[%c0, %c0_0] : memref<8x4xi32, #tpu.memory_space<vmem>>, vector<8x4xi32>
    %c0_1 = arith.constant 0 : index
    %c0_2 = arith.constant 0 : index
    %1 = vector.load %arg2[%c0_1, %c0_2] : memref<18x32xf32, #tpu.memory_space<vmem>>, vector<18x32xf32>
    %2 = tpu.iota {dimensions = array<i32: 1>} : vector<8x18xi32>
    %3 = vector.extract_strided_slice %0 {offsets = [0, 0], sizes = [8, 1], strides = [1, 1]} : vector<8x4xi32> to vector<8x1xi32>
    %4 = vector.broadcast %3 : vector<8x1xi32> to vector<8x18xi32>
    %5 = arith.cmpi eq, %2, %4 : vector<8x18xi32>
    %6 = arith.extui %5 : vector<8x18xi1> to vector<8x18xi32>
    %7 = arith.sitofp %6 : vector<8x18xi32> to vector<8x18xf32>
    %cst = arith.constant dense<0.000000e+00> : vector<8x32xf32>
    %8 = tpu.matmul %7, %1, %cst {dimension_numbers = #tpu.dot_dimension_numbers<[1], [0], [0], [1], [0, 0, 1, 1], [], []>, precision = #tpu.contract_precision<fp32>} : vector<8x18xf32>, vector<18x32xf32>, vector<8x32xf32> -> vector<8x32xf32>
    %9 = vector.extract_strided_slice %0 {offsets = [0, 1], sizes = [8, 1], strides = [1, 1]} : vector<8x4xi32> to vector<8x1xi32>
    %10 = vector.broadcast %9 : vector<8x1xi32> to vector<8x18xi32>
    %11 = arith.cmpi eq, %2, %10 : vector<8x18xi32>
    %12 = arith.extui %11 : vector<8x18xi1> to vector<8x18xi32>
    %13 = arith.sitofp %12 : vector<8x18xi32> to vector<8x18xf32>
    %cst_3 = arith.constant dense<0.000000e+00> : vector<8x32xf32>
    %14 = tpu.matmul %13, %1, %cst_3 {dimension_numbers = #tpu.dot_dimension_numbers<[1], [0], [0], [1], [0, 0, 1, 1], [], []>, precision = #tpu.contract_precision<fp32>} : vector<8x18xf32>, vector<18x32xf32>, vector<8x32xf32> -> vector<8x32xf32>
    %15 = vector.extract_strided_slice %0 {offsets = [0, 2], sizes = [8, 1], strides = [1, 1]} : vector<8x4xi32> to vector<8x1xi32>
    %16 = vector.broadcast %15 : vector<8x1xi32> to vector<8x18xi32>
    %17 = arith.cmpi eq, %2, %16 : vector<8x18xi32>
    %18 = arith.extui %17 : vector<8x18xi1> to vector<8x18xi32>
    %19 = arith.sitofp %18 : vector<8x18xi32> to vector<8x18xf32>
    %cst_4 = arith.constant dense<0.000000e+00> : vector<8x32xf32>
    %20 = tpu.matmul %19, %1, %cst_4 {dimension_numbers = #tpu.dot_dimension_numbers<[1], [0], [0], [1], [0, 0, 1, 1], [], []>, precision = #tpu.contract_precision<fp32>} : vector<8x18xf32>, vector<18x32xf32>, vector<8x32xf32> -> vector<8x32xf32>
    %21 = vector.extract_strided_slice %0 {offsets = [0, 3], sizes = [8, 1], strides = [1, 1]} : vector<8x4xi32> to vector<8x1xi32>
    %22 = vector.broadcast %21 : vector<8x1xi32> to vector<8x18xi32>
    %23 = arith.cmpi eq, %2, %22 : vector<8x18xi32>
    %24 = arith.extui %23 : vector<8x18xi1> to vector<8x18xi32>
    %25 = arith.sitofp %24 : vector<8x18xi32> to vector<8x18xf32>
    %cst_5 = arith.constant dense<0.000000e+00> : vector<8x32xf32>
    %26 = tpu.matmul %25, %1, %cst_5 {dimension_numbers = #tpu.dot_dimension_numbers<[1], [0], [0], [1], [0, 0, 1, 1], [], []>, precision = #tpu.contract_precision<fp32>} : vector<8x18xf32>, vector<18x32xf32>, vector<8x32xf32> -> vector<8x32xf32>
    %27 = tpu.concatenate %8, %14, %20, %26 in 1 : vector<8x32xf32>, vector<8x32xf32>, vector<8x32xf32>, vector<8x32xf32> -> vector<8x128xf32>
    %c0_6 = arith.constant 0 : index
    %c0_7 = arith.constant 0 : index
    %28 = vector.load %arg3[%c0_6, %c0_7] : memref<8x128xf32, #tpu.memory_space<vmem>>, vector<8x128xf32>
    tpu.vector_store %arg3[%c0_6, %c0_7], %27 {strides = array<i32>} : memref<8x128xf32, #tpu.memory_space<vmem>>, vector<8x128xf32>,
    return
  }
  func.func @transform_0(%arg0: i32) -> (i32, i32) {
    %c0_i32 = arith.constant 0 : i32
    %c0_i32_0 = arith.constant 0 : i32
    return %arg0, %c0_i32 : i32, i32
  }
  func.func @transform_1(%arg0: i32) -> (i32, i32) {
    %c0_i32 = arith.constant 0 : i32
    %c0_i32_0 = arith.constant 0 : i32
    %c0_i32_1 = arith.constant 0 : i32
    return %c0_i32, %c0_i32_0 : i32, i32
  }
  func.func @transform_2(%arg0: i32) -> (i32, i32) {
    %c0_i32 = arith.constant 0 : i32
    %c0_i32_0 = arith.constant 0 : i32
    return %arg0, %c0_i32 : i32, i32
  }
}

</mosaic_0001>

<llo_original>
// kernel: tpu_custom_call.1
$region0: #{tpu_custom_call.1}
  #allocation0 [shape = 'u32[]', space=smem, size = 0x4, offset = 0x4, fixed_abs, tag = 'smem constant byte address 0x4 - core index']
  #allocation1 [shape = 'u32[144,128]{1,0:T(1,128)}', space=vmem, size = 0x12000, scoped, tag = 'internal scratch']
  %s0 = inlined_call_operand.vmem [shape: s32[8,4], index: 0, kind: input, shape index: {}]
  %s1 = inlined_call_operand.hbm [shape: f32[18,32], index: 1, kind: input, shape index: {}]
  %s2 = inlined_call_operand.hbm [shape: f32[8,128], index: 2, kind: output, shape index: {}]
  %s3 = sld [smem:[#allocation0]]
  $region22: #{tpu_custom_call.1} parent=0
    _
  %s5 = ssub.s32 1, %s3
  %s6 = scalar_select 0, %s5, %s3
  $region1: #{tpu_custom_call.1} parent=0
    #allocation2 [shape = 'u8[12288]{0}', space=vmem, size = 0x3000, scoped, tag = 'input window, operand 1, single buffered']
    #allocation3 [shape = 's32[1]{0}', space=sflag, size = 0x4, scoped, tag = 'scoped memory for tpu_custom_call.1']
    #allocation4 [shape = 's32[1]{0}', space=sflag, size = 0x4, scoped, tag = 'scoped memory for tpu_custom_call.1']
    #allocation5 [shape = 'u8[4096]{0}', space=vmem, size = 0x1000, scoped, tag = 'output window, operand 0, single buffered']
    %7 = vsyncpa [#allocation3], 0
    %8 = vsyncpa [#allocation4], 0
    // Predicated region
    $region2: #{tpu_custom_call.1} parent=1 // pred_check
      _
    $region3: #{tpu_custom_call.1} parent=1 // pred_check_branch
      %10 = sbr.rel (0) target = $region5
    $region4: #{tpu_custom_call.1} parent=1 // pred_region
      _
    $region5: #{tpu_custom_call.1} parent=1 // pred_fallthru
      _
    // Predicated region
    $region6: #{tpu_custom_call.1} parent=1 // pred_check
      _
    $region7: #{tpu_custom_call.1} parent=1 // pred_check_branch
      %12 = sbr.rel (0) target = $region9
    $region8: #{tpu_custom_call.1} parent=1 // pred_region
      %s14 = ssub.s32 384, 384
      %15 = vsyncadd [#allocation3], %s14
      %s16 = sshll.u32 [#allocation2], 4
      %s17 = int_to_ptr.vmem [resolvable:$true] %s16
      %22 = dma.hbm_to_vmem [thread:$0]  %s1, 384, %s17, [#allocation3], 128, 128, 8
    $region9: #{tpu_custom_call.1} parent=1 // pred_fallthru
      _
    // Predicated region
    $region10: #{tpu_custom_call.1} parent=1 // pred_check
      _
    $region11: #{tpu_custom_call.1} parent=1 // pred_check_branch
      %24 = sbr.rel (0) target = $region13
    $region12: #{tpu_custom_call.1} parent=1 // pred_region
      %25 = dma.done [#allocation3], 384
    $region13: #{tpu_custom_call.1} parent=1 // pred_fallthru
      _
    %v26 = vld [vmem:[%s0] sm:$0xff]
    %v27 = vld [vmem:[#allocation2] sm:$0xff]
    %v28 = vld [vmem:[#allocation2 + $0x8] sm:$0xff]
    %v29 = vld [vmem:[#allocation2 + $0x10] sm:$0x3]
    %v30 = vlaneseq
    %v31 = vand.u32 %v30, 127
    %32 = vset.pattern.permute.xlu0 0
    %33 = vperm.xlu0 %32, %v26
    %v34 = vpop.permute.xlu0 %33
    %vm35 = vcmp.eq.s32.totalorder %v31, %v34
    %v36 = vsel %vm35, 1, 0
    %v37 = vcvt.s32.f32 %v36
    %vm38 = vcmask 146432
    %v40 = vsel %vm38, %v37, 0
    %vm42 = vcmask 1041408
    %v44 = vsel %vm42, %v29, 0
    %46 = vmatprep.subr.mxu0 0.0
    %v47 = vand.u32 %v27, 4294901760
    %48 = vmatpush1.msra.mxu0 %v47
    %49 = vmatprep.subr.mxu0 0.0
    %v50 = vand.u32 %v28, 4294901760
    %51 = vmatpush1.msra.mxu0 %v50
    %52 = vmatprep.subr.mxu0 0.0
    %v53 = vand.u32 %v44, 4294901760
    %54 = vmatpush1.msra.mxu0 %v53
    %55 = vmatprep.subr.mxu0 0.0
    %56 = vmatpush1.msra.mxu0 0.0
    %57 = vmatprep.subr.mxu0 0.0
    %58 = vmatpush1.msra.mxu0 0.0
    %59 = vmatprep.subr.mxu0 0.0
    %60 = vmatpush1.msra.mxu0 0.0
    %61 = vmatprep.subr.mxu0 0.0
    %62 = vmatpush1.msra.mxu0 0.0
    %63 = vmatprep.subr.mxu0 0.0
    %64 = vmatpush1.msra.mxu0 0.0
    %65 = vmatprep.subr.mxu0 0.0
    %66 = vmatpush1.msra.mxu0 0.0
    %67 = vmatprep.subr.mxu0 0.0
    %68 = vmatpush1.msra.mxu0 0.0
    %69 = vmatprep.subr.mxu0 0.0
    %70 = vmatpush1.msra.mxu0 0.0
    %71 = vmatprep.subr.mxu0 0.0
    %72 = vmatpush1.msra.mxu0 0.0
    %73 = vmatprep.subr.mxu0 0.0
    %74 = vmatpush1.msra.mxu0 0.0
    %75 = vmatprep.subr.mxu0 0.0
    %76 = vmatpush1.msra.mxu0 0.0
    %77 = vmatprep.subr.mxu0 0.0
    %78 = vmatpush1.msra.mxu0 0.0
    %79 = vmatprep.subr.mxu0 0.0
    %80 = vmatpush1.msra.mxu0 0.0
    %81 = vmatprep.subr.mxu0 0.0
    %82 = vmatpush1.msra.mxu0 0.0
    %83 = vmatprep.subr.mxu0 0.0
    %84 = vmatpush1.msra.mxu0 0.0
    %85 = vmatprep.subr.mxu0 0.0
    %86 = vmatpush1.msra.mxu0 0.0
    %87 = vmatprep.subr.mxu0 0.0
    %88 = vmatpush1.msra.mxu0 0.0
    %89 = vmatprep.subr.mxu0 0.0
    %90 = vmatpush1.msra.mxu0 0.0
    %91 = vmatprep.subr.mxu0 0.0
    %92 = vmatpush1.msra.mxu0 0.0
    %93 = vmatprep.subr.mxu0 0.0
    %94 = vmatpush1.msra.mxu0 0.0
    %95 = vmatprep.subr.mxu0 0.0
    %96 = vmatpush1.msra.mxu0 0.0
    %97 = vmatprep.subr.mxu0 0.0
    %98 = vmatpush1.msra.mxu0 0.0
    %99 = vmatprep.subr.mxu0 0.0
    %100 = vmatpush1.msra.mxu0 0.0
    %101 = vmatprep.subr.mxu0 0.0
    %102 = vmatpush1.msra.mxu0 0.0
    %103 = vmatprep.subr.mxu0 0.0
    %104 = vmatpush1.msra.mxu0 0.0
    %105 = vmatprep.subr.mxu0 0.0
    %106 = vmatpush1.msra.mxu0 0.0
    %107 = vmatprep.subr.mxu0 0.0
    %108 = vmatpush1.msra.mxu0 0.0
    %109 = vmatprep.subr.mxu0 0.0
    %110 = vmatpush1.msra.mxu0 0.0
    %111 = vmatprep.subr.mxu0 0.0
    %112 = vmatpush1.msra.mxu0 0.0
    %113 = vmatprep.mubr.f32.mxu0 0.0
    %v114 = vand.u32 %v40, 4294901760
    %v115 = vsub.f32 %v40, %v114
    %v116 = vand.u32 %v115, 4294901760
    %v117 = vsub.f32 %v115, %v116
    %v118 = vand.u32 %v117, 4294901760
    %119 = vmatmul.mubr.f32.gmra.mrb[0].mxu0 %v118
    %v120 = vpop.f32.mrb[0].mxu0
    %v121 = vadd.f32 0.0, %v120
    %v122 = vpop.f32.mrb[0].mxu0
    %123 = vdwg.mxu0
    %124 = vmatprep.subr.mxu0 0.0
    %v125 = vand.u32 %v27, 4294901760
    %v126 = vsub.f32 %v27, %v125
    %v127 = vand.u32 %v126, 4294901760
    %v128 = vsub.f32 %v126, %v127
    %v129 = vand.u32 %v128, 4294901760
    %130 = vmatpush1.msra.mxu0 %v129
    %131 = vmatprep.subr.mxu0 0.0
    %v132 = vand.u32 %v28, 4294901760
    %v133 = vsub.f32 %v28, %v132
    %v134 = vand.u32 %v133, 4294901760
    %v135 = vsub.f32 %v133, %v134
    %v136 = vand.u32 %v135, 4294901760
    %137 = vmatpush1.msra.mxu0 %v136
    %138 = vmatprep.subr.mxu0 0.0
    %v139 = vand.u32 %v44, 4294901760
    %v140 = vsub.f32 %v44, %v139
    %v141 = vand.u32 %v140, 4294901760
    %v142 = vsub.f32 %v140, %v141
    %v143 = vand.u32 %v142, 4294901760
    %144 = vmatpush1.msra.mxu0 %v143
    %145 = vmatprep.subr.mxu0 0.0
    %146 = vmatpush1.msra.mxu0 0.0
    %147 = vmatprep.subr.mxu0 0.0
    %148 = vmatpush1.msra.mxu0 0.0
    %149 = vmatprep.subr.mxu0 0.0
    %150 = vmatpush1.msra.mxu0 0.0
    %151 = vmatprep.subr.mxu0 0.0
    %152 = vmatpush1.msra.mxu0 0.0
    %153 = vmatprep.subr.mxu0 0.0
    %154 = vmatpush1.msra.mxu0 0.0
    %155 = vmatprep.subr.mxu0 0.0
    %156 = vmatpush1.msra.mxu0 0.0
    %157 = vmatprep.subr.mxu0 0.0
    %158 = vmatpush1.msra.mxu0 0.0
    %159 = vmatprep.subr.mxu0 0.0
    %160 = vmatpush1.msra.mxu0 0.0
    %161 = vmatprep.subr.mxu0 0.0
    %162 = vmatpush1.msra.mxu0 0.0
    %163 = vmatprep.subr.mxu0 0.0
    %164 = vmatpush1.msra.mxu0 0.0
    %165 = vmatprep.subr.mxu0 0.0
    %166 = vmatpush1.msra.mxu0 0.0
    %167 = vmatprep.subr.mxu0 0.0
    %168 = vmatpush1.msra.mxu0 0.0
    %169 = vmatprep.subr.mxu0 0.0
    %170 = vmatpush1.msra.mxu0 0.0
    %171 = vmatprep.subr.mxu0 0.0
    %172 = vmatpush1.msra.mxu0 0.0
    %173 = vmatprep.subr.mxu0 0.0
    %174 = vmatpush1.msra.mxu0 0.0
    %175 = vmatprep.subr.mxu0 0.0
    %176 = vmatpush1.msra.mxu0 0.0
    %177 = vmatprep.subr.mxu0 0.0
    %178 = vmatpush1.msra.mxu0 0.0
    %179 = vmatprep.subr.mxu0 0.0
    %180 = vmatpush1.msra.mxu0 0.0
    %181 = vmatprep.subr.mxu0 0.0
    %182 = vmatpush1.msra.mxu0 0.0
    %183 = vmatprep.subr.mxu0 0.0
    %184 = vmatpush1.msra.mxu0 0.0
    %185 = vmatprep.subr.mxu0 0.0
    %186 = vmatpush1.msra.mxu0 0.0
    %187 = vmatprep.subr.mxu0 0.0
    %188 = vmatpush1.msra.mxu0 0.0
    %189 = vmatprep.subr.mxu0 0.0
    %190 = vmatpush1.msra.mxu0 0.0
    %191 = vmatprep.subr.mxu0 0.0
    %192 = vmatpush1.msra.mxu0 0.0
    %193 = vmatprep.subr.mxu0 0.0
    %194 = vmatpush1.msra.mxu0 0.0
    %195 = vmatprep.subr.mxu0 0.0
    %196 = vmatpush1.msra.mxu0 0.0
    %197 = vmatprep.subr.mxu0 0.0
    %198 = vmatpush1.msra.mxu0 0.0
    %199 = vmatprep.subr.mxu0 0.0
    %200 = vmatpush1.msra.mxu0 0.0
    %201 = vmatprep.subr.mxu0 0.0
    %202 = vmatpush1.msra.mxu0 0.0
    %203 = vmatprep.mubr.f32.mxu0 0.0
    %v204 = vand.u32 %v40, 4294901760
    %205 = vmatmul.mubr.f32.gmra.mrb[0].mxu0 %v204
    %v206 = vpop.f32.mrb[0].mxu0
    %v207 = vadd.f32 %v121, %v206
    %v208 = vpop.f32.mrb[0].mxu0
    %209 = vdwg.mxu0
    %210 = vmatprep.subr.mxu0 0.0
    %v211 = vand.u32 %v27, 4294901760
    %v212 = vsub.f32 %v27, %v211
    %213 = vmatpush1.msra.mxu0 %v212
    %214 = vmatprep.subr.mxu0 0.0
    %v215 = vand.u32 %v28, 4294901760
    %v216 = vsub.f32 %v28, %v215
    %217 = vmatpush1.msra.mxu0 %v216
    %218 = vmatprep.subr.mxu0 0.0
    %v219 = vand.u32 %v44, 4294901760
    %v220 = vsub.f32 %v44, %v219
    %221 = vmatpush1.msra.mxu0 %v220
    %222 = vmatprep.subr.mxu0 0.0
    %223 = vmatpush1.msra.mxu0 0.0
    %224 = vmatprep.subr.mxu0 0.0
    %225 = vmatpush1.msra.mxu0 0.0
    %226 = vmatprep.subr.mxu0 0.0
    %227 = vmatpush1.msra.mxu0 0.0
    %228 = vmatprep.subr.mxu0 0.0
    %229 = vmatpush1.msra.mxu0 0.0
    %230 = vmatprep.subr.mxu0 0.0
    %231 = vmatpush1.msra.mxu0 0.0
    %232 = vmatprep.subr.mxu0 0.0
    %233 = vmatpush1.msra.mxu0 0.0
    %234 = vmatprep.subr.mxu0 0.0
    %235 = vmatpush1.msra.mxu0 0.0
    %236 = vmatprep.subr.mxu0 0.0
    %237 = vmatpush1.msra.mxu0 0.0
    %238 = vmatprep.subr.mxu0 0.0
    %239 = vmatpush1.msra.mxu0 0.0
    %240 = vmatprep.subr.mxu0 0.0
    %241 = vmatpush1.msra.mxu0 0.0
    %242 = vmatprep.subr.mxu0 0.0
    %243 = vmatpush1.msra.mxu0 0.0
    %244 = vmatprep.subr.mxu0 0.0
    %245 = vmatpush1.msra.mxu0 0.0
    %246 = vmatprep.subr.mxu0 0.0
    %247 = vmatpush1.msra.mxu0 0.0
    %248 = vmatprep.subr.mxu0 0.0
    %249 = vmatpush1.msra.mxu0 0.0
    %250 = vmatprep.subr.mxu0 0.0
    %251 = vmatpush1.msra.mxu0 0.0
    %252 = vmatprep.subr.mxu0 0.0
    %253 = vmatpush1.msra.mxu0 0.0
    %254 = vmatprep.subr.mxu0 0.0
    %255 = vmatpush1.msra.mxu0 0.0
    %256 = vmatprep.subr.mxu0 0.0
    %257 = vmatpush1.msra.mxu0 0.0
    %258 = vmatprep.subr.mxu0 0.0
    %259 = vmatpush1.msra.mxu0 0.0
    %260 = vmatprep.subr.mxu0 0.0
    %261 = vmatpush1.msra.mxu0 0.0
    %262 = vmatprep.subr.mxu0 0.0
    %263 = vmatpush1.msra.mxu0 0.0
    %264 = vmatprep.subr.mxu0 0.0
    %265 = vmatpush1.msra.mxu0 0.0
    %266 = vmatprep.subr.mxu0 0.0
    %267 = vmatpush1.msra.mxu0 0.0
    %268 = vmatprep.subr.mxu0 0.0
    %269 = vmatpush1.msra.mxu0 0.0
    %270 = vmatprep.subr.mxu0 0.0
    %271 = vmatpush1.msra.mxu0 0.0
    %272 = vmatprep.subr.mxu0 0.0
    %273 = vmatpush1.msra.mxu0 0.0
    %274 = vmatprep.subr.mxu0 0.0
    %275 = vmatpush1.msra.mxu0 0.0
    %276 = vmatprep.subr.mxu0 0.0
    %277 = vmatpush1.msra.mxu0 0.0
    %278 = vmatprep.subr.mxu0 0.0
    %279 = vmatpush1.msra.mxu0 0.0
    %280 = vmatprep.mubr.f32.mxu0 0.0
    %v281 = vand.u32 %v40, 4294901760
    %v282 = vsub.f32 %v40, %v281
    %283 = vmatmul.mubr.f32.gmra.mrb[0].mxu0 %v282
    %v284 = vpop.f32.mrb[0].mxu0
    %v285 = vadd.f32 %v207, %v284
    %v286 = vpop.f32.mrb[0].mxu0
    %287 = vdwg.mxu0
    %288 = vmatprep.subr.mxu0 0.0
    %v289 = vand.u32 %v27, 4294901760
    %290 = vmatpush1.msra.mxu0 %v289
    %291 = vmatprep.subr.mxu0 0.0
    %v292 = vand.u32 %v28, 4294901760
    %293 = vmatpush1.msra.mxu0 %v292
    %294 = vmatprep.subr.mxu0 0.0
    %v295 = vand.u32 %v44, 4294901760
    %296 = vmatpush1.msra.mxu0 %v295
    %297 = vmatprep.subr.mxu0 0.0
    %298 = vmatpush1.msra.mxu0 0.0
    %299 = vmatprep.subr.mxu0 0.0
    %300 = vmatpush1.msra.mxu0 0.0
    %301 = vmatprep.subr.mxu0 0.0
    %302 = vmatpush1.msra.mxu0 0.0
    %303 = vmatprep.subr.mxu0 0.0
    %304 = vmatpush1.msra.mxu0 0.0
    %305 = vmatprep.subr.mxu0 0.0
    %306 = vmatpush1.msra.mxu0 0.0
    %307 = vmatprep.subr.mxu0 0.0
    %308 = vmatpush1.msra.mxu0 0.0
    %309 = vmatprep.subr.mxu0 0.0
    %310 = vmatpush1.msra.mxu0 0.0
    %311 = vmatprep.subr.mxu0 0.0
    %312 = vmatpush1.msra.mxu0 0.0
    %313 = vmatprep.subr.mxu0 0.0
    %314 = vmatpush1.msra.mxu0 0.0
    %315 = vmatprep.subr.mxu0 0.0
    %316 = vmatpush1.msra.mxu0 0.0
    %317 = vmatprep.subr.mxu0 0.0
    %318 = vmatpush1.msra.mxu0 0.0
    %319 = vmatprep.subr.mxu0 0.0
    %320 = vmatpush1.msra.mxu0 0.0
    %321 = vmatprep.subr.mxu0 0.0
    %322 = vmatpush1.msra.mxu0 0.0
    %323 = vmatprep.subr.mxu0 0.0
    %324 = vmatpush1.msra.mxu0 0.0
    %325 = vmatprep.subr.mxu0 0.0
    %326 = vmatpush1.msra.mxu0 0.0
    %327 = vmatprep.subr.mxu0 0.0
    %328 = vmatpush1.msra.mxu0 0.0
    %329 = vmatprep.subr.mxu0 0.0
    %330 = vmatpush1.msra.mxu0 0.0
    %331 = vmatprep.subr.mxu0 0.0
    %332 = vmatpush1.msra.mxu0 0.0
    %333 = vmatprep.subr.mxu0 0.0
    %334 = vmatpush1.msra.mxu0 0.0
    %335 = vmatprep.subr.mxu0 0.0
    %336 = vmatpush1.msra.mxu0 0.0
    %337 = vmatprep.subr.mxu0 0.0
    %338 = vmatpush1.msra.mxu0 0.0
    %339 = vmatprep.subr.mxu0 0.0
    %340 = vmatpush1.msra.mxu0 0.0
    %341 = vmatprep.subr.mxu0 0.0
    %342 = vmatpush1.msra.mxu0 0.0
    %343 = vmatprep.subr.mxu0 0.0
    %344 = vmatpush1.msra.mxu0 0.0
    %345 = vmatprep.subr.mxu0 0.0
    %346 = vmatpush1.msra.mxu0 0.0
    %347 = vmatprep.subr.mxu0 0.0
    %348 = vmatpush1.msra.mxu0 0.0
    %349 = vmatprep.subr.mxu0 0.0
    %350 = vmatpush1.msra.mxu0 0.0
    %351 = vmatprep.subr.mxu0 0.0
    %352 = vmatpush1.msra.mxu0 0.0
    %353 = vmatprep.subr.mxu0 0.0
    %354 = vmatpush1.msra.mxu0 0.0
    %355 = vmatprep.mubr.f32.mxu0 0.0
    %v356 = vand.u32 %v40, 4294901760
    %v357 = vsub.f32 %v40, %v356
    %v358 = vand.u32 %v357, 4294901760
    %359 = vmatmul.mubr.f32.gmra.mrb[0].mxu0 %v358
    %v360 = vpop.f32.mrb[0].mxu0
    %v361 = vadd.f32 %v285, %v360
    %v362 = vpop.f32.mrb[0].mxu0
    %363 = vdwg.mxu0
    %364 = vmatprep.subr.mxu0 0.0
    %v365 = vand.u32 %v27, 4294901760
    %v366 = vsub.f32 %v27, %v365
    %v367 = vand.u32 %v366, 4294901760
    %368 = vmatpush1.msra.mxu0 %v367
    %369 = vmatprep.subr.mxu0 0.0
    %v370 = vand.u32 %v28, 4294901760
    %v371 = vsub.f32 %v28, %v370
    %v372 = vand.u32 %v371, 4294901760
    %373 = vmatpush1.msra.mxu0 %v372
    %374 = vmatprep.subr.mxu0 0.0
    %v375 = vand.u32 %v44, 4294901760
    %v376 = vsub.f32 %v44, %v375
    %v377 = vand.u32 %v376, 4294901760
    %378 = vmatpush1.msra.mxu0 %v377
    %379 = vmatprep.subr.mxu0 0.0
    %380 = vmatpush1.msra.mxu0 0.0
    %381 = vmatprep.subr.mxu0 0.0
    %382 = vmatpush1.msra.mxu0 0.0
    %383 = vmatprep.subr.mxu0 0.0
    %384 = vmatpush1.msra.mxu0 0.0
    %385 = vmatprep.subr.mxu0 0.0
    %386 = vmatpush1.msra.mxu0 0.0
    %387 = vmatprep.subr.mxu0 0.0
    %388 = vmatpush1.msra.mxu0 0.0
    %389 = vmatprep.subr.mxu0 0.0
    %390 = vmatpush1.msra.mxu0 0.0
    %391 = vmatprep.subr.mxu0 0.0
    %392 = vmatpush1.msra.mxu0 0.0
    %393 = vmatprep.subr.mxu0 0.0
    %394 = vmatpush1.msra.mxu0 0.0
    %395 = vmatprep.subr.mxu0 0.0
    %396 = vmatpush1.msra.mxu0 0.0
    %397 = vmatprep.subr.mxu0 0.0
    %398 = vmatpush1.msra.mxu0 0.0
    %399 = vmatprep.subr.mxu0 0.0
    %400 = vmatpush1.msra.mxu0 0.0
    %401 = vmatprep.subr.mxu0 0.0
    %402 = vmatpush1.msra.mxu0 0.0
    %403 = vmatprep.subr.mxu0 0.0
    %404 = vmatpush1.msra.mxu0 0.0
    %405 = vmatprep.subr.mxu0 0.0
    %406 = vmatpush1.msra.mxu0 0.0
    %407 = vmatprep.subr.mxu0 0.0
    %408 = vmatpush1.msra.mxu0 0.0
    %409 = vmatprep.subr.mxu0 0.0
    %410 = vmatpush1.msra.mxu0 0.0
    %411 = vmatprep.subr.mxu0 0.0
    %412 = vmatpush1.msra.mxu0 0.0
    %413 = vmatprep.subr.mxu0 0.0
    %414 = vmatpush1.msra.mxu0 0.0
    %415 = vmatprep.subr.mxu0 0.0
    %416 = vmatpush1.msra.mxu0 0.0
    %417 = vmatprep.subr.mxu0 0.0
    %418 = vmatpush1.msra.mxu0 0.0
    %419 = vmatprep.subr.mxu0 0.0
    %420 = vmatpush1.msra.mxu0 0.0
    %421 = vmatprep.subr.mxu0 0.0
    %422 = vmatpush1.msra.mxu0 0.0
    %423 = vmatprep.subr.mxu0 0.0
    %424 = vmatpush1.msra.mxu0 0.0
    %425 = vmatprep.subr.mxu0 0.0
    %426 = vmatpush1.msra.mxu0 0.0
    %427 = vmatprep.subr.mxu0 0.0
    %428 = vmatpush1.msra.mxu0 0.0
    %429 = vmatprep.subr.mxu0 0.0
    %430 = vmatpush1.msra.mxu0 0.0
    %431 = vmatprep.subr.mxu0 0.0
    %432 = vmatpush1.msra.mxu0 0.0
    %433 = vmatprep.subr.mxu0 0.0
    %434 = vmatpush1.msra.mxu0 0.0
    %435 = vmatprep.subr.mxu0 0.0
    %436 = vmatpush1.msra.mxu0 0.0
    %437 = vmatprep.mubr.f32.mxu0 0.0
    %v438 = vand.u32 %v40, 4294901760
    %439 = vmatmul.mubr.f32.gmra.mrb[0].mxu0 %v438
    %v440 = vpop.f32.mrb[0].mxu0
    %v441 = vadd.f32 %v361, %v440
    %v442 = vpop.f32.mrb[0].mxu0
    %443 = vdwg.mxu0
    %444 = vmatprep.subr.mxu0 0.0
    %v445 = vand.u32 %v27, 4294901760
    %446 = vmatpush1.msra.mxu0 %v445
    %447 = vmatprep.subr.mxu0 0.0
    %v448 = vand.u32 %v28, 4294901760
    %449 = vmatpush1.msra.mxu0 %v448
    %450 = vmatprep.subr.mxu0 0.0
    %v451 = vand.u32 %v44, 4294901760
    %452 = vmatpush1.msra.mxu0 %v451
    %453 = vmatprep.subr.mxu0 0.0
    %454 = vmatpush1.msra.mxu0 0.0
    %455 = vmatprep.subr.mxu0 0.0
    %456 = vmatpush1.msra.mxu0 0.0
    %457 = vmatprep.subr.mxu0 0.0
    %458 = vmatpush1.msra.mxu0 0.0
    %459 = vmatprep.subr.mxu0 0.0
    %460 = vmatpush1.msra.mxu0 0.0
    %461 = vmatprep.subr.mxu0 0.0
    %462 = vmatpush1.msra.mxu0 0.0
    %463 = vmatprep.subr.mxu0 0.0
    %464 = vmatpush1.msra.mxu0 0.0
    %465 = vmatprep.subr.mxu0 0.0
    %466 = vmatpush1.msra.mxu0 0.0
    %467 = vmatprep.subr.mxu0 0.0
    %468 = vmatpush1.msra.mxu0 0.0
    %469 = vmatprep.subr.mxu0 0.0
    %470 = vmatpush1.msra.mxu0 0.0
    %471 = vmatprep.subr.mxu0 0.0
    %472 = vmatpush1.msra.mxu0 0.0
    %473 = vmatprep.subr.mxu0 0.0
    %474 = vmatpush1.msra.mxu0 0.0
    %475 = vmatprep.subr.mxu0 0.0
    %476 = vmatpush1.msra.mxu0 0.0
    %477 = vmatprep.subr.mxu0 0.0
    %478 = vmatpush1.msra.mxu0 0.0
    %479 = vmatprep.subr.mxu0 0.0
    %480 = vmatpush1.msra.mxu0 0.0
    %481 = vmatprep.subr.mxu0 0.0
    %482 = vmatpush1.msra.mxu0 0.0
    %483 = vmatprep.subr.mxu0 0.0
    %484 = vmatpush1.msra.mxu0 0.0
    %485 = vmatprep.subr.mxu0 0.0
    %486 = vmatpush1.msra.mxu0 0.0
    %487 = vmatprep.subr.mxu0 0.0
    %488 = vmatpush1.msra.mxu0 0.0
    %489 = vmatprep.subr.mxu0 0.0
    %490 = vmatpush1.msra.mxu0 0.0
    %491 = vmatprep.subr.mxu0 0.0
    %492 = vmatpush1.msra.mxu0 0.0
    %493 = vmatprep.subr.mxu0 0.0
    %494 = vmatpush1.msra.mxu0 0.0
    %495 = vmatprep.subr.mxu0 0.0
    %496 = vmatpush1.msra.mxu0 0.0
    %497 = vmatprep.subr.mxu0 0.0
    %498 = vmatpush1.msra.mxu0 0.0
    %499 = vmatprep.subr.mxu0 0.0
    %500 = vmatpush1.msra.mxu0 0.0
    %501 = vmatprep.subr.mxu0 0.0
    %502 = vmatpush1.msra.mxu0 0.0
    %503 = vmatprep.subr.mxu0 0.0
    %504 = vmatpush1.msra.mxu0 0.0
    %505 = vmatprep.subr.mxu0 0.0
    %506 = vmatpush1.msra.mxu0 0.0
    %507 = vmatprep.subr.mxu0 0.0
    %508 = vmatpush1.msra.mxu0 0.0
    %509 = vmatprep.subr.mxu0 0.0
    %510 = vmatpush1.msra.mxu0 0.0
    %511 = vmatprep.mubr.f32.mxu0 0.0
    %v512 = vand.u32 %v40, 4294901760
    %513 = vmatmul.mubr.f32.gmra.mrb[0].mxu0 %v512
    %v514 = vpop.f32.mrb[0].mxu0
    %v515 = vadd.f32 %v441, %v514
    %v516 = vpop.f32.mrb[0].mxu0
    %517 = vdwg.mxu0
    %518 = vset.pattern.permute.xlu0 1
    %519 = vperm.xlu0 %518, %v26
    %v520 = vpop.permute.xlu0 %519
    %vm521 = vcmp.eq.s32.totalorder %v31, %v520
    %v522 = vsel %vm521, 1, 0
    %v523 = vcvt.s32.f32 %v522
    %v525 = vsel %vm38, %v523, 0
    %527 = vmatprep.subr.mxu0 0.0
    %v528 = vand.u32 %v27, 4294901760
    %529 = vmatpush1.msra.mxu0 %v528
    %530 = vmatprep.subr.mxu0 0.0
    %v531 = vand.u32 %v28, 4294901760
    %532 = vmatpush1.msra.mxu0 %v531
    %533 = vmatprep.subr.mxu0 0.0
    %v534 = vand.u32 %v44, 4294901760
    %535 = vmatpush1.msra.mxu0 %v534
    %536 = vmatprep.subr.mxu0 0.0
    %537 = vmatpush1.msra.mxu0 0.0
    %538 = vmatprep.subr.mxu0 0.0
    %539 = vmatpush1.msra.mxu0 0.0
    %540 = vmatprep.subr.mxu0 0.0
    %541 = vmatpush1.msra.mxu0 0.0
    %542 = vmatprep.subr.mxu0 0.0
    %543 = vmatpush1.msra.mxu0 0.0
    %544 = vmatprep.subr.mxu0 0.0
    %545 = vmatpush1.msra.mxu0 0.0
    %546 = vmatprep.subr.mxu0 0.0
    %547 = vmatpush1.msra.mxu0 0.0
    %548 = vmatprep.subr.mxu0 0.0
    %549 = vmatpush1.msra.mxu0 0.0
    %550 = vmatprep.subr.mxu0 0.0
    %551 = vmatpush1.msra.mxu0 0.0
    %552 = vmatprep.subr.mxu0 0.0
    %553 = vmatpush1.msra.mxu0 0.0
    %554 = vmatprep.subr.mxu0 0.0
    %555 = vmatpush1.msra.mxu0 0.0
    %556 = vmatprep.subr.mxu0 0.0
    %557 = vmatpush1.msra.mxu0 0.0
    %558 = vmatprep.subr.mxu0 0.0
    %559 = vmatpush1.msra.mxu0 0.0
    %560 = vmatprep.subr.mxu0 0.0
    %561 = vmatpush1.msra.mxu0 0.0
    %562 = vmatprep.subr.mxu0 0.0
    %563 = vmatpush1.msra.mxu0 0.0
    %564 = vmatprep.subr.mxu0 0.0
    %565 = vmatpush1.msra.mxu0 0.0
    %566 = vmatprep.subr.mxu0 0.0
    %567 = vmatpush1.msra.mxu0 0.0
    %568 = vmatprep.subr.mxu0 0.0
    %569 = vmatpush1.msra.mxu0 0.0
    %570 = vmatprep.subr.mxu0 0.0
    %571 = vmatpush1.msra.mxu0 0.0
    %572 = vmatprep.subr.mxu0 0.0
    %573 = vmatpush1.msra.mxu0 0.0
    %574 = vmatprep.subr.mxu0 0.0
    %575 = vmatpush1.msra.mxu0 0.0
    %576 = vmatprep.subr.mxu0 0.0
    %577 = vmatpush1.msra.mxu0 0.0
    %578 = vmatprep.subr.mxu0 0.0
    %579 = vmatpush1.msra.mxu0 0.0
    %580 = vmatprep.subr.mxu0 0.0
    %581 = vmatpush1.msra.mxu0 0.0
    %582 = vmatprep.subr.mxu0 0.0
    %583 = vmatpush1.msra.mxu0 0.0
    %584 = vmatprep.subr.mxu0 0.0
    %585 = vmatpush1.msra.mxu0 0.0
    %586 = vmatprep.subr.mxu0 0.0
    %587 = vmatpush1.msra.mxu0 0.0
    %588 = vmatprep.subr.mxu0 0.0
    %589 = vmatpush1.msra.mxu0 0.0
    %590 = vmatprep.subr.mxu0 0.0
    %591 = vmatpush1.msra.mxu0 0.0
    %592 = vmatprep.subr.mxu0 0.0
    %593 = vmatpush1.msra.mxu0 0.0
    %594 = vmatprep.mubr.f32.mxu0 0.0
    %v595 = vand.u32 %v525, 4294901760
    %v596 = vsub.f32 %v525, %v595
    %v597 = vand.u32 %v596, 4294901760
    %v598 = vsub.f32 %v596, %v597
    %v599 = vand.u32 %v598, 4294901760
    %600 = vmatmul.mubr.f32.gmra.mrb[0].mxu0 %v599
    %v601 = vpop.f32.mrb[0].mxu0
    %v602 = vadd.f32 0.0, %v601
    %v603 = vpop.f32.mrb[0].mxu0
    %604 = vdwg.mxu0
    %605 = vmatprep.subr.mxu0 0.0
    %v606 = vand.u32 %v27, 4294901760
    %v607 = vsub.f32 %v27, %v606
    %v608 = vand.u32 %v607, 4294901760
    %v609 = vsub.f32 %v607, %v608
    %v610 = vand.u32 %v609, 4294901760
    %611 = vmatpush1.msra.mxu0 %v610
    %612 = vmatprep.subr.mxu0 0.0
    %v613 = vand.u32 %v28, 4294901760
    %v614 = vsub.f32 %v28, %v613
    %v615 = vand.u32 %v614, 4294901760
    %v616 = vsub.f32 %v614, %v615
    %v617 = vand.u32 %v616, 4294901760
    %618 = vmatpush1.msra.mxu0 %v617
    %619 = vmatprep.subr.mxu0 0.0
    %v620 = vand.u32 %v44, 4294901760
    %v621 = vsub.f32 %v44, %v620
    %v622 = vand.u32 %v621, 4294901760
    %v623 = vsub.f32 %v621, %v622
    %v624 = vand.u32 %v623, 4294901760
    %625 = vmatpush1.msra.mxu0 %v624
    %626 = vmatprep.subr.mxu0 0.0
    %627 = vmatpush1.msra.mxu0 0.0
    %628 = vmatprep.subr.mxu0 0.0
    %629 = vmatpush1.msra.mxu0 0.0
    %630 = vmatprep.subr.mxu0 0.0
    %631 = vmatpush1.msra.mxu0 0.0
    %632 = vmatprep.subr.mxu0 0.0
    %633 = vmatpush1.msra.mxu0 0.0
    %634 = vmatprep.subr.mxu0 0.0
    %635 = vmatpush1.msra.mxu0 0.0
    %636 = vmatprep.subr.mxu0 0.0
    %637 = vmatpush1.msra.mxu0 0.0
    %638 = vmatprep.subr.mxu0 0.0
    %639 = vmatpush1.msra.mxu0 0.0
    %640 = vmatprep.subr.mxu0 0.0
    %641 = vmatpush1.msra.mxu0 0.0
    %642 = vmatprep.subr.mxu0 0.0
    %643 = vmatpush1.msra.mxu0 0.0
    %644 = vmatprep.subr.mxu0 0.0
    %645 = vmatpush1.msra.mxu0 0.0
    %646 = vmatprep.subr.mxu0 0.0
    %647 = vmatpush1.msra.mxu0 0.0
    %648 = vmatprep.subr.mxu0 0.0
    %649 = vmatpush1.msra.mxu0 0.0
    %650 = vmatprep.subr.mxu0 0.0
    %651 = vmatpush1.msra.mxu0 0.0
    %652 = vmatprep.subr.mxu0 0.0
    %653 = vmatpush1.msra.mxu0 0.0
    %654 = vmatprep.subr.mxu0 0.0
    %655 = vmatpush1.msra.mxu0 0.0
    %656 = vmatprep.subr.mxu0 0.0
    %657 = vmatpush1.msra.mxu0 0.0
    %658 = vmatprep.subr.mxu0 0.0
    %659 = vmatpush1.msra.mxu0 0.0
    %660 = vmatprep.subr.mxu0 0.0
    %661 = vmatpush1.msra.mxu0 0.0
    %662 = vmatprep.subr.mxu0 0.0
    %663 = vmatpush1.msra.mxu0 0.0
    %664 = vmatprep.subr.mxu0 0.0
    %665 = vmatpush1.msra.mxu0 0.0
    %666 = vmatprep.subr.mxu0 0.0
    %667 = vmatpush1.msra.mxu0 0.0
    %668 = vmatprep.subr.mxu0 0.0
    %669 = vmatpush1.msra.mxu0 0.0
    %670 = vmatprep.subr.mxu0 0.0
    %671 = vmatpush1.msra.mxu0 0.0
    %672 = vmatprep.subr.mxu0 0.0
    %673 = vmatpush1.msra.mxu0 0.0
    %674 = vmatprep.subr.mxu0 0.0
    %675 = vmatpush1.msra.mxu0 0.0
    %676 = vmatprep.subr.mxu0 0.0
    %677 = vmatpush1.msra.mxu0 0.0
    %678 = vmatprep.subr.mxu0 0.0
    %679 = vmatpush1.msra.mxu0 0.0
    %680 = vmatprep.subr.mxu0 0.0
    %681 = vmatpush1.msra.mxu0 0.0
    %682 = vmatprep.subr.mxu0 0.0
    %683 = vmatpush1.msra.mxu0 0.0
    %684 = vmatprep.mubr.f32.mxu0 0.0
    %v685 = vand.u32 %v525, 4294901760
    %686 = vmatmul.mubr.f32.gmra.mrb[0].mxu0 %v685
    %v687 = vpop.f32.mrb[0].mxu0
    %v688 = vadd.f32 %v602, %v687
    %v689 = vpop.f32.mrb[0].mxu0
    %690 = vdwg.mxu0
    %691 = vmatprep.subr.mxu0 0.0
    %v692 = vand.u32 %v27, 4294901760
    %v693 = vsub.f32 %v27, %v692
    %694 = vmatpush1.msra.mxu0 %v693
    %695 = vmatprep.subr.mxu0 0.0
    %v696 = vand.u32 %v28, 4294901760
    %v697 = vsub.f32 %v28, %v696
    %698 = vmatpush1.msra.mxu0 %v697
    %699 = vmatprep.subr.mxu0 0.0
    %v700 = vand.u32 %v44, 4294901760
    %v701 = vsub.f32 %v44, %v700
    %702 = vmatpush1.msra.mxu0 %v701
    %703 = vmatprep.subr.mxu0 0.0
    %704 = vmatpush1.msra.mxu0 0.0
    %705 = vmatprep.subr.mxu0 0.0
    %706 = vmatpush1.msra.mxu0 0.0
    %707 = vmatprep.subr.mxu0 0.0
    %708 = vmatpush1.msra.mxu0 0.0
    %709 = vmatprep.subr.mxu0 0.0
    %710 = vmatpush1.msra.mxu0 0.0
    %711 = vmatprep.subr.mxu0 0.0
    %712 = vmatpush1.msra.mxu0 0.0
    %713 = vmatprep.subr.mxu0 0.0
    %714 = vmatpush1.msra.mxu0 0.0
    %715 = vmatprep.subr.mxu0 0.0
    %716 = vmatpush1.msra.mxu0 0.0
    %717 = vmatprep.subr.mxu0 0.0
    %718 = vmatpush1.msra.mxu0 0.0
    %719 = vmatprep.subr.mxu0 0.0
    %720 = vmatpush1.msra.mxu0 0.0
    %721 = vmatprep.subr.mxu0 0.0
    %722 = vmatpush1.msra.mxu0 0.0
    %723 = vmatprep.subr.mxu0 0.0
    %724 = vmatpush1.msra.mxu0 0.0
    %725 = vmatprep.subr.mxu0 0.0
    %726 = vmatpush1.msra.mxu0 0.0
    %727 = vmatprep.subr.mxu0 0.0
    %728 = vmatpush1.msra.mxu0 0.0
    %729 = vmatprep.subr.mxu0 0.0
    %730 = vmatpush1.msra.mxu0 0.0
    %731 = vmatprep.subr.mxu0 0.0
    %732 = vmatpush1.msra.mxu0 0.0
    %733 = vmatprep.subr.mxu0 0.0
    %734 = vmatpush1.msra.mxu0 0.0
    %735 = vmatprep.subr.mxu0 0.0
    %736 = vmatpush1.msra.mxu0 0.0
    %737 = vmatprep.subr.mxu0 0.0
    %738 = vmatpush1.msra.mxu0 0.0
    %739 = vmatprep.subr.mxu0 0.0
    %740 = vmatpush1.msra.mxu0 0.0
    %741 = vmatprep.subr.mxu0 0.0
    %742 = vmatpush1.msra.mxu0 0.0
    %743 = vmatprep.subr.mxu0 0.0
    %744 = vmatpush1.msra.mxu0 0.0
    %745 = vmatprep.subr.mxu0 0.0
    %746 = vmatpush1.msra.mxu0 0.0
    %747 = vmatprep.subr.mxu0 0.0
    %748 = vmatpush1.msra.mxu0 0.0
    %749 = vmatprep.subr.mxu0 0.0
    %750 = vmatpush1.msra.mxu0 0.0
    %751 = vmatprep.subr.mxu0 0.0
    %752 = vmatpush1.msra.mxu0 0.0
    %753 = vmatprep.subr.mxu0 0.0
    %754 = vmatpush1.msra.mxu0 0.0
    %755 = vmatprep.subr.mxu0 0.0
    %756 = vmatpush1.msra.mxu0 0.0
    %757 = vmatprep.subr.mxu0 0.0
    %758 = vmatpush1.msra.mxu0 0.0
    %759 = vmatprep.subr.mxu0 0.0
    %760 = vmatpush1.msra.mxu0 0.0
    %761 = vmatprep.mubr.f32.mxu0 0.0
    %v762 = vand.u32 %v525, 4294901760
    %v763 = vsub.f32 %v525, %v762
    %764 = vmatmul.mubr.f32.gmra.mrb[0].mxu0 %v763
    %v765 = vpop.f32.mrb[0].mxu0
    %v766 = vadd.f32 %v688, %v765
    %v767 = vpop.f32.mrb[0].mxu0
    %768 = vdwg.mxu0
    %769 = vmatprep.subr.mxu0 0.0
    %v770 = vand.u32 %v27, 4294901760
    %771 = vmatpush1.msra.mxu0 %v770
    %772 = vmatprep.subr.mxu0 0.0
    %v773 = vand.u32 %v28, 4294901760
    %774 = vmatpush1.msra.mxu0 %v773
    %775 = vmatprep.subr.mxu0 0.0
    %v776 = vand.u32 %v44, 4294901760
    %777 = vmatpush1.msra.mxu0 %v776
    %778 = vmatprep.subr.mxu0 0.0
    %779 = vmatpush1.msra.mxu0 0.0
    %780 = vmatprep.subr.mxu0 0.0
    %781 = vmatpush1.msra.mxu0 0.0
    %782 = vmatprep.subr.mxu0 0.0
    %783 = vmatpush1.msra.mxu0 0.0
    %784 = vmatprep.subr.mxu0 0.0
    %785 = vmatpush1.msra.mxu0 0.0
    %786 = vmatprep.subr.mxu0 0.0
    %787 = vmatpush1.msra.mxu0 0.0
    %788 = vmatprep.subr.mxu0 0.0
    %789 = vmatpush1.msra.mxu0 0.0
    %790 = vmatprep.subr.mxu0 0.0
    %791 = vmatpush1.msra.mxu0 0.0
    %792 = vmatprep.subr.mxu0 0.0
    %793 = vmatpush1.msra.mxu0 0.0
    %794 = vmatprep.subr.mxu0 0.0
    %795 = vmatpush1.msra.mxu0 0.0
    %796 = vmatprep.subr.mxu0 0.0
    %797 = vmatpush1.msra.mxu0 0.0
    %798 = vmatprep.subr.mxu0 0.0
    %799 = vmatpush1.msra.mxu0 0.0
    %800 = vmatprep.subr.mxu0 0.0
    %801 = vmatpush1.msra.mxu0 0.0
    %802 = vmatprep.subr.mxu0 0.0
    %803 = vmatpush1.msra.mxu0 0.0
    %804 = vmatprep.subr.mxu0 0.0
    %805 = vmatpush1.msra.mxu0 0.0
    %806 = vmatprep.subr.mxu0 0.0
    %807 = vmatpush1.msra.mxu0 0.0
    %808 = vmatprep.subr.mxu0 0.0
    %809 = vmatpush1.msra.mxu0 0.0
    %810 = vmatprep.subr.mxu0 0.0
    %811 = vmatpush1.msra.mxu0 0.0
    %812 = vmatprep.subr.mxu0 0.0
    %813 = vmatpush1.msra.mxu0 0.0
    %814 = vmatprep.subr.mxu0 0.0
    %815 = vmatpush1.msra.mxu0 0.0
    %816 = vmatprep.subr.mxu0 0.0
    %817 = vmatpush1.msra.mxu0 0.0
    %818 = vmatprep.subr.mxu0 0.0
    %819 = vmatpush1.msra.mxu0 0.0
    %820 = vmatprep.subr.mxu0 0.0
    %821 = vmatpush1.msra.mxu0 0.0
    %822 = vmatprep.subr.mxu0 0.0
    %823 = vmatpush1.msra.mxu0 0.0
    %824 = vmatprep.subr.mxu0 0.0
    %825 = vmatpush1.msra.mxu0 0.0
    %826 = vmatprep.subr.mxu0 0.0
    %827 = vmatpush1.msra.mxu0 0.0
    %828 = vmatprep.subr.mxu0 0.0
    %829 = vmatpush1.msra.mxu0 0.0
    %830 = vmatprep.subr.mxu0 0.0
    %831 = vmatpush1.msra.mxu0 0.0
    %832 = vmatprep.subr.mxu0 0.0
    %833 = vmatpush1.msra.mxu0 0.0
    %834 = vmatprep.subr.mxu0 0.0
    %835 = vmatpush1.msra.mxu0 0.0
    %836 = vmatprep.mubr.f32.mxu0 0.0
    %v837 = vand.u32 %v525, 4294901760
    %v838 = vsub.f32 %v525, %v837
    %v839 = vand.u32 %v838, 4294901760
    %840 = vmatmul.mubr.f32.gmra.mrb[0].mxu0 %v839
    %v841 = vpop.f32.mrb[0].mxu0
    %v842 = vadd.f32 %v766, %v841
    %v843 = vpop.f32.mrb[0].mxu0
    %844 = vdwg.mxu0
    %845 = vmatprep.subr.mxu0 0.0
    %v846 = vand.u32 %v27, 4294901760
    %v847 = vsub.f32 %v27, %v846
    %v848 = vand.u32 %v847, 4294901760
    %849 = vmatpush1.msra.mxu0 %v848
    %850 = vmatprep.subr.mxu0 0.0
    %v851 = vand.u32 %v28, 4294901760
    %v852 = vsub.f32 %v28, %v851
    %v853 = vand.u32 %v852, 4294901760
    %854 = vmatpush1.msra.mxu0 %v853
    %855 = vmatprep.subr.mxu0 0.0
    %v856 = vand.u32 %v44, 4294901760
    %v857 = vsub.f32 %v44, %v856
    %v858 = vand.u32 %v857, 4294901760
    %859 = vmatpush1.msra.mxu0 %v858
    %860 = vmatprep.subr.mxu0 0.0
    %861 = vmatpush1.msra.mxu0 0.0
    %862 = vmatprep.subr.mxu0 0.0
    %863 = vmatpush1.msra.mxu0 0.0
    %864 = vmatprep.subr.mxu0 0.0
    %865 = vmatpush1.msra.mxu0 0.0
    %866 = vmatprep.subr.mxu0 0.0
    %867 = vmatpush1.msra.mxu0 0.0
    %868 = vmatprep.subr.mxu0 0.0
    %869 = vmatpush1.msra.mxu0 0.0
    %870 = vmatprep.subr.mxu0 0.0
    %871 = vmatpush1.msra.mxu0 0.0
    %872 = vmatprep.subr.mxu0 0.0
    %873 = vmatpush1.msra.mxu0 0.0
    %874 = vmatprep.subr.mxu0 0.0
    %875 = vmatpush1.msra.mxu0 0.0
    %876 = vmatprep.subr.mxu0 0.0
    %877 = vmatpush1.msra.mxu0 0.0
    %878 = vmatprep.subr.mxu0 0.0
    %879 = vmatpush1.msra.mxu0 0.0
    %880 = vmatprep.subr.mxu0 0.0
    %881 = vmatpush1.msra.mxu0 0.0
    %882 = vmatprep.subr.mxu0 0.0
    %883 = vmatpush1.msra.mxu0 0.0
    %884 = vmatprep.subr.mxu0 0.0
    %885 = vmatpush1.msra.mxu0 0.0
    %886 = vmatprep.subr.mxu0 0.0
    %887 = vmatpush1.msra.mxu0 0.0
    %888 = vmatprep.subr.mxu0 0.0
    %889 = vmatpush1.msra.mxu0 0.0
    %890 = vmatprep.subr.mxu0 0.0
    %891 = vmatpush1.msra.mxu0 0.0
    %892 = vmatprep.subr.mxu0 0.0
    %893 = vmatpush1.msra.mxu0 0.0
    %894 = vmatprep.subr.mxu0 0.0
    %895 = vmatpush1.msra.mxu0 0.0
    %896 = vmatprep.subr.mxu0 0.0
    %897 = vmatpush1.msra.mxu0 0.0
    %898 = vmatprep.subr.mxu0 0.0
    %899 = vmatpush1.msra.mxu0 0.0
    %900 = vmatprep.subr.mxu0 0.0
    %901 = vmatpush1.msra.mxu0 0.0
    %902 = vmatprep.subr.mxu0 0.0
    %903 = vmatpush1.msra.mxu0 0.0
    %904 = vmatprep.subr.mxu0 0.0
    %905 = vmatpush1.msra.mxu0 0.0
    %906 = vmatprep.subr.mxu0 0.0
    %907 = vmatpush1.msra.mxu0 0.0
    %908 = vmatprep.subr.mxu0 0.0
    %909 = vmatpush1.msra.mxu0 0.0
    %910 = vmatprep.subr.mxu0 0.0
    %911 = vmatpush1.msra.mxu0 0.0
    %912 = vmatprep.subr.mxu0 0.0
    %913 = vmatpush1.msra.mxu0 0.0
    %914 = vmatprep.subr.mxu0 0.0
    %915 = vmatpush1.msra.mxu0 0.0
    %916 = vmatprep.subr.mxu0 0.0
    %917 = vmatpush1.msra.mxu0 0.0
    %918 = vmatprep.mubr.f32.mxu0 0.0
    %v919 = vand.u32 %v525, 4294901760
    %920 = vmatmul.mubr.f32.gmra.mrb[0].mxu0 %v919
    %v921 = vpop.f32.mrb[0].mxu0
    %v922 = vadd.f32 %v842, %v921
    %v923 = vpop.f32.mrb[0].mxu0
    %924 = vdwg.mxu0
    %925 = vmatprep.subr.mxu0 0.0
    %v926 = vand.u32 %v27, 4294901760
    %927 = vmatpush1.msra.mxu0 %v926
    %928 = vmatprep.subr.mxu0 0.0
    %v929 = vand.u32 %v28, 4294901760
    %930 = vmatpush1.msra.mxu0 %v929
    %931 = vmatprep.subr.mxu0 0.0
    %v932 = vand.u32 %v44, 4294901760
    %933 = vmatpush1.msra.mxu0 %v932
    %934 = vmatprep.subr.mxu0 0.0
    %935 = vmatpush1.msra.mxu0 0.0
    %936 = vmatprep.subr.mxu0 0.0
    %937 = vmatpush1.msra.mxu0 0.0
    %938 = vmatprep.subr.mxu0 0.0
    %939 = vmatpush1.msra.mxu0 0.0
    %940 = vmatprep.subr.mxu0 0.0
    %941 = vmatpush1.msra.mxu0 0.0
    %942 = vmatprep.subr.mxu0 0.0
    %943 = vmatpush1.msra.mxu0 0.0
    %944 = vmatprep.subr.mxu0 0.0
    %945 = vmatpush1.msra.mxu0 0.0
    %946 = vmatprep.subr.mxu0 0.0
    %947 = vmatpush1.msra.mxu0 0.0
    %948 = vmatprep.subr.mxu0 0.0
    %949 = vmatpush1.msra.mxu0 0.0
    %950 = vmatprep.subr.mxu0 0.0
    %951 = vmatpush1.msra.mxu0 0.0
    %952 = vmatprep.subr.mxu0 0.0
    %953 = vmatpush1.msra.mxu0 0.0
    %954 = vmatprep.subr.mxu0 0.0
    %955 = vmatpush1.msra.mxu0 0.0
    %956 = vmatprep.subr.mxu0 0.0
    %957 = vmatpush1.msra.mxu0 0.0
    %958 = vmatprep.subr.mxu0 0.0
    %959 = vmatpush1.msra.mxu0 0.0
    %960 = vmatprep.subr.mxu0 0.0
    %961 = vmatpush1.msra.mxu0 0.0
    %962 = vmatprep.subr.mxu0 0.0
    %963 = vmatpush1.msra.mxu0 0.0
    %964 = vmatprep.subr.mxu0 0.0
    %965 = vmatpush1.msra.mxu0 0.0
    %966 = vmatprep.subr.mxu0 0.0
    %967 = vmatpush1.msra.mxu0 0.0
    %968 = vmatprep.subr.mxu0 0.0
    %969 = vmatpush1.msra.mxu0 0.0
    %970 = vmatprep.subr.mxu0 0.0
    %971 = vmatpush1.msra.mxu0 0.0
    %972 = vmatprep.subr.mxu0 0.0
    %973 = vmatpush1.msra.mxu0 0.0
    %974 = vmatprep.subr.mxu0 0.0
    %975 = vmatpush1.msra.mxu0 0.0
    %976 = vmatprep.subr.mxu0 0.0
    %977 = vmatpush1.msra.mxu0 0.0
    %978 = vmatprep.subr.mxu0 0.0
    %979 = vmatpush1.msra.mxu0 0.0
    %980 = vmatprep.subr.mxu0 0.0
    %981 = vmatpush1.msra.mxu0 0.0
    %982 = vmatprep.subr.mxu0 0.0
    %983 = vmatpush1.msra.mxu0 0.0
    %984 = vmatprep.subr.mxu0 0.0
    %985 = vmatpush1.msra.mxu0 0.0
    %986 = vmatprep.subr.mxu0 0.0
    %987 = vmatpush1.msra.mxu0 0.0
    %988 = vmatprep.subr.mxu0 0.0
    %989 = vmatpush1.msra.mxu0 0.0
    %990 = vmatprep.subr.mxu0 0.0
    %991 = vmatpush1.msra.mxu0 0.0
    %992 = vmatprep.mubr.f32.mxu0 0.0
    %v993 = vand.u32 %v525, 4294901760
    %994 = vmatmul.mubr.f32.gmra.mrb[0].mxu0 %v993
    %v995 = vpop.f32.mrb[0].mxu0
    %v996 = vadd.f32 %v922, %v995
    %v997 = vpop.f32.mrb[0].mxu0
    %998 = vdwg.mxu0
    %999 = vset.pattern.permute.xlu0 2
    %1000 = vperm.xlu0 %999, %v26
    %v1001 = vpop.permute.xlu0 %1000
    %vm1002 = vcmp.eq.s32.totalorder %v31, %v1001
    %v1003 = vsel %vm1002, 1, 0
    %v1004 = vcvt.s32.f32 %v1003
    %v1006 = vsel %vm38, %v1004, 0
    %1008 = vmatprep.subr.mxu0 0.0
    %v1009 = vand.u32 %v27, 4294901760
    %1010 = vmatpush1.msra.mxu0 %v1009
    %1011 = vmatprep.subr.mxu0 0.0
    %v1012 = vand.u32 %v28, 4294901760
    %1013 = vmatpush1.msra.mxu0 %v1012
    %1014 = vmatprep.subr.mxu0 0.0
    %v1015 = vand.u32 %v44, 4294901760
    %1016 = vmatpush1.msra.mxu0 %v1015
    %1017 = vmatprep.subr.mxu0 0.0
    %1018 = vmatpush1.msra.mxu0 0.0
    %1019 = vmatprep.subr.mxu0 0.0
    %1020 = vmatpush1.msra.mxu0 0.0
    %1021 = vmatprep.subr.mxu0 0.0
    %1022 = vmatpush1.msra.mxu0 0.0
    %1023 = vmatprep.subr.mxu0 0.0
    %1024 = vmatpush1.msra.mxu0 0.0
    %1025 = vmatprep.subr.mxu0 0.0
    %1026 = vmatpush1.msra.mxu0 0.0
    %1027 = vmatprep.subr.mxu0 0.0
    %1028 = vmatpush1.msra.mxu0 0.0
    %1029 = vmatprep.subr.mxu0 0.0
    %1030 = vmatpush1.msra.mxu0 0.0
    %1031 = vmatprep.subr.mxu0 0.0
    %1032 = vmatpush1.msra.mxu0 0.0
    %1033 = vmatprep.subr.mxu0 0.0
    %1034 = vmatpush1.msra.mxu0 0.0
    %1035 = vmatprep.subr.mxu0 0.0
    %1036 = vmatpush1.msra.mxu0 0.0
    %1037 = vmatprep.subr.mxu0 0.0
    %1038 = vmatpush1.msra.mxu0 0.0
    %1039 = vmatprep.subr.mxu0 0.0
    %1040 = vmatpush1.msra.mxu0 0.0
    %1041 = vmatprep.subr.mxu0 0.0
    %1042 = vmatpush1.msra.mxu0 0.0
    %1043 = vmatprep.subr.mxu0 0.0
    %1044 = vmatpush1.msra.mxu0 0.0
    %1045 = vmatprep.subr.mxu0 0.0
    %1046 = vmatpush1.msra.mxu0 0.0
    %1047 = vmatprep.subr.mxu0 0.0
    %1048 = vmatpush1.msra.mxu0 0.0
    %1049 = vmatprep.subr.mxu0 0.0
    %1050 = vmatpush1.msra.mxu0 0.0
    %1051 = vmatprep.subr.mxu0 0.0
    %1052 = vmatpush1.msra.mxu0 0.0
    %1053 = vmatprep.subr.mxu0 0.0
    %1054 = vmatpush1.msra.mxu0 0.0
    %1055 = vmatprep.subr.mxu0 0.0
    %1056 = vmatpush1.msra.mxu0 0.0
    %1057 = vmatprep.subr.mxu0 0.0
    %1058 = vmatpush1.msra.mxu0 0.0
    %1059 = vmatprep.subr.mxu0 0.0
    %1060 = vmatpush1.msra.mxu0 0.0
    %1061 = vmatprep.subr.mxu0 0.0
    %1062 = vmatpush1.msra.mxu0 0.0
    %1063 = vmatprep.subr.mxu0 0.0
    %1064 = vmatpush1.msra.mxu0 0.0
    %1065 = vmatprep.subr.mxu0 0.0
    %1066 = vmatpush1.msra.mxu0 0.0
    %1067 = vmatprep.subr.mxu0 0.0
    %1068 = vmatpush1.msra.mxu0 0.0
    %1069 = vmatprep.subr.mxu0 0.0
    %1070 = vmatpush1.msra.mxu0 0.0
    %1071 = vmatprep.subr.mxu0 0.0
    %1072 = vmatpush1.msra.mxu0 0.0
    %1073 = vmatprep.subr.mxu0 0.0
    %1074 = vmatpush1.msra.mxu0 0.0
    %1075 = vmatprep.mubr.f32.mxu0 0.0
    %v1076 = vand.u32 %v1006, 4294901760
    %v1077 = vsub.f32 %v1006, %v1076
    %v1078 = vand.u32 %v1077, 4294901760
    %v1079 = vsub.f32 %v1077, %v1078
    %v1080 = vand.u32 %v1079, 4294901760
    %1081 = vmatmul.mubr.f32.gmra.mrb[0].mxu0 %v1080
    %v1082 = vpop.f32.mrb[0].mxu0
    %v1083 = vadd.f32 0.0, %v1082
    %v1084 = vpop.f32.mrb[0].mxu0
    %1085 = vdwg.mxu0
    %1086 = vmatprep.subr.mxu0 0.0
    %v1087 = vand.u32 %v27, 4294901760
    %v1088 = vsub.f32 %v27, %v1087
    %v1089 = vand.u32 %v1088, 4294901760
    %v1090 = vsub.f32 %v1088, %v1089
    %v1091 = vand.u32 %v1090, 4294901760
    %1092 = vmatpush1.msra.mxu0 %v1091
    %1093 = vmatprep.subr.mxu0 0.0
    %v1094 = vand.u32 %v28, 4294901760
    %v1095 = vsub.f32 %v28, %v1094
    %v1096 = vand.u32 %v1095, 4294901760
    %v1097 = vsub.f32 %v1095, %v1096
    %v1098 = vand.u32 %v1097, 4294901760
    %1099 = vmatpush1.msra.mxu0 %v1098
    %1100 = vmatprep.subr.mxu0 0.0
    %v1101 = vand.u32 %v44, 4294901760
    %v1102 = vsub.f32 %v44, %v1101
    %v1103 = vand.u32 %v1102, 4294901760
    %v1104 = vsub.f32 %v1102, %v1103
    %v1105 = vand.u32 %v1104, 4294901760
    %1106 = vmatpush1.msra.mxu0 %v1105
    %1107 = vmatprep.subr.mxu0 0.0
    %1108 = vmatpush1.msra.mxu0 0.0
    %1109 = vmatprep.subr.mxu0 0.0
    %1110 = vmatpush1.msra.mxu0 0.0
    %1111 = vmatprep.subr.mxu0 0.0
    %1112 = vmatpush1.msra.mxu0 0.0
    %1113 = vmatprep.subr.mxu0 0.0
    %1114 = vmatpush1.msra.mxu0 0.0
    %1115 = vmatprep.subr.mxu0 0.0
    %1116 = vmatpush1.msra.mxu0 0.0
    %1117 = vmatprep.subr.mxu0 0.0
    %1118 = vmatpush1.msra.mxu0 0.0
    %1119 = vmatprep.subr.mxu0 0.0
    %1120 = vmatpush1.msra.mxu0 0.0
    %1121 = vmatprep.subr.mxu0 0.0
    %1122 = vmatpush1.msra.mxu0 0.0
    %1123 = vmatprep.subr.mxu0 0.0
    %1124 = vmatpush1.msra.mxu0 0.0
    %1125 = vmatprep.subr.mxu0 0.0
    %1126 = vmatpush1.msra.mxu0 0.0
    %1127 = vmatprep.subr.mxu0 0.0
    %1128 = vmatpush1.msra.mxu0 0.0
    %1129 = vmatprep.subr.mxu0 0.0
    %1130 = vmatpush1.msra.mxu0 0.0
    %1131 = vmatprep.subr.mxu0 0.0
    %1132 = vmatpush1.msra.mxu0 0.0
    %1133 = vmatprep.subr.mxu0 0.0
    %1134 = vmatpush1.msra.mxu0 0.0
    %1135 = vmatprep.subr.mxu0 0.0
    %1136 = vmatpush1.msra.mxu0 0.0
    %1137 = vmatprep.subr.mxu0 0.0
    %1138 = vmatpush1.msra.mxu0 0.0
    %1139 = vmatprep.subr.mxu0 0.0
    %1140 = vmatpush1.msra.mxu0 0.0
    %1141 = vmatprep.subr.mxu0 0.0
    %1142 = vmatpush1.msra.mxu0 0.0
    %1143 = vmatprep.subr.mxu0 0.0
    %1144 = vmatpush1.msra.mxu0 0.0
    %1145 = vmatprep.subr.mxu0 0.0
    %1146 = vmatpush1.msra.mxu0 0.0
    %1147 = vmatprep.subr.mxu0 0.0
    %1148 = vmatpush1.msra.mxu0 0.0
    %1149 = vmatprep.subr.mxu0 0.0
    %1150 = vmatpush1.msra.mxu0 0.0
    %1151 = vmatprep.subr.mxu0 0.0
    %1152 = vmatpush1.msra.mxu0 0.0
    %1153 = vmatprep.subr.mxu0 0.0
    %1154 = vmatpush1.msra.mxu0 0.0
    %1155 = vmatprep.subr.mxu0 0.0
    %1156 = vmatpush1.msra.mxu0 0.0
    %1157 = vmatprep.subr.mxu0 0.0
    %1158 = vmatpush1.msra.mxu0 0.0
    %1159 = vmatprep.subr.mxu0 0.0
    %1160 = vmatpush1.msra.mxu0 0.0
    %1161 = vmatprep.subr.mxu0 0.0
    %1162 = vmatpush1.msra.mxu0 0.0
    %1163 = vmatprep.subr.mxu0 0.0
    %1164 = vmatpush1.msra.mxu0 0.0
    %1165 = vmatprep.mubr.f32.mxu0 0.0
    %v1166 = vand.u32 %v1006, 4294901760
    %1167 = vmatmul.mubr.f32.gmra.mrb[0].mxu0 %v1166
    %v1168 = vpop.f32.mrb[0].mxu0
    %v1169 = vadd.f32 %v1083, %v1168
    %v1170 = vpop.f32.mrb[0].mxu0
    %1171 = vdwg.mxu0
    %1172 = vmatprep.subr.mxu0 0.0
    %v1173 = vand.u32 %v27, 4294901760
    %v1174 = vsub.f32 %v27, %v1173
    %1175 = vmatpush1.msra.mxu0 %v1174
    %1176 = vmatprep.subr.mxu0 0.0
    %v1177 = vand.u32 %v28, 4294901760
    %v1178 = vsub.f32 %v28, %v1177
    %1179 = vmatpush1.msra.mxu0 %v1178
    %1180 = vmatprep.subr.mxu0 0.0
    %v1181 = vand.u32 %v44, 4294901760
    %v1182 = vsub.f32 %v44, %v1181
    %1183 = vmatpush1.msra.mxu0 %v1182
    %1184 = vmatprep.subr.mxu0 0.0
    %1185 = vmatpush1.msra.mxu0 0.0
    %1186 = vmatprep.subr.mxu0 0.0
    %1187 = vmatpush1.msra.mxu0 0.0
    %1188 = vmatprep.subr.mxu0 0.0
    %1189 = vmatpush1.msra.mxu0 0.0
    %1190 = vmatprep.subr.mxu0 0.0
    %1191 = vmatpush1.msra.mxu0 0.0
    %1192 = vmatprep.subr.mxu0 0.0
    %1193 = vmatpush1.msra.mxu0 0.0
    %1194 = vmatprep.subr.mxu0 0.0
    %1195 = vmatpush1.msra.mxu0 0.0
    %1196 = vmatprep.subr.mxu0 0.0
    %1197 = vmatpush1.msra.mxu0 0.0
    %1198 = vmatprep.subr.mxu0 0.0
    %1199 = vmatpush1.msra.mxu0 0.0
    %1200 = vmatprep.subr.mxu0 0.0
    %1201 = vmatpush1.msra.mxu0 0.0
    %1202 = vmatprep.subr.mxu0 0.0
    %1203 = vmatpush1.msra.mxu0 0.0
    %1204 = vmatprep.subr.mxu0 0.0
    %1205 = vmatpush1.msra.mxu0 0.0
    %1206 = vmatprep.subr.mxu0 0.0
    %1207 = vmatpush1.msra.mxu0 0.0
    %1208 = vmatprep.subr.mxu0 0.0
    %1209 = vmatpush1.msra.mxu0 0.0
    %1210 = vmatprep.subr.mxu0 0.0
    %1211 = vmatpush1.msra.mxu0 0.0
    %1212 = vmatprep.subr.mxu0 0.0
    %1213 = vmatpush1.msra.mxu0 0.0
    %1214 = vmatprep.subr.mxu0 0.0
    %1215 = vmatpush1.msra.mxu0 0.0
    %1216 = vmatprep.subr.mxu0 0.0
    %1217 = vmatpush1.msra.mxu0 0.0
    %1218 = vmatprep.subr.mxu0 0.0
    %1219 = vmatpush1.msra.mxu0 0.0
    %1220 = vmatprep.subr.mxu0 0.0
    %1221 = vmatpush1.msra.mxu0 0.0
    %1222 = vmatprep.subr.mxu0 0.0
    %1223 = vmatpush1.msra.mxu0 0.0
    %1224 = vmatprep.subr.mxu0 0.0
    %1225 = vmatpush1.msra.mxu0 0.0
    %1226 = vmatprep.subr.mxu0 0.0
    %1227 = vmatpush1.msra.mxu0 0.0
    %1228 = vmatprep.subr.mxu0 0.0
    %1229 = vmatpush1.msra.mxu0 0.0
    %1230 = vmatprep.subr.mxu0 0.0
    %1231 = vmatpush1.msra.mxu0 0.0
    %1232 = vmatprep.subr.mxu0 0.0
    %1233 = vmatpush1.msra.mxu0 0.0
    %1234 = vmatprep.subr.mxu0 0.0
    %1235 = vmatpush1.msra.mxu0 0.0
    %1236 = vmatprep.subr.mxu0 0.0
    %1237 = vmatpush1.msra.mxu0 0.0
    %1238 = vmatprep.subr.mxu0 0.0
    %1239 = vmatpush1.msra.mxu0 0.0
    %1240 = vmatprep.subr.mxu0 0.0
    %1241 = vmatpush1.msra.mxu0 0.0
    %1242 = vmatprep.mubr.f32.mxu0 0.0
    %v1243 = vand.u32 %v1006, 4294901760
    %v1244 = vsub.f32 %v1006, %v1243
    %1245 = vmatmul.mubr.f32.gmra.mrb[0].mxu0 %v1244
    %v1246 = vpop.f32.mrb[0].mxu0
    %v1247 = vadd.f32 %v1169, %v1246
    %v1248 = vpop.f32.mrb[0].mxu0
    %1249 = vdwg.mxu0
    %1250 = vmatprep.subr.mxu0 0.0
    %v1251 = vand.u32 %v27, 4294901760
    %1252 = vmatpush1.msra.mxu0 %v1251
    %1253 = vmatprep.subr.mxu0 0.0
    %v1254 = vand.u32 %v28, 4294901760
    %1255 = vmatpush1.msra.mxu0 %v1254
    %1256 = vmatprep.subr.mxu0 0.0
    %v1257 = vand.u32 %v44, 4294901760
    %1258 = vmatpush1.msra.mxu0 %v1257
    %1259 = vmatprep.subr.mxu0 0.0
    %1260 = vmatpush1.msra.mxu0 0.0
    %1261 = vmatprep.subr.mxu0 0.0
    %1262 = vmatpush1.msra.mxu0 0.0
    %1263 = vmatprep.subr.mxu0 0.0
    %1264 = vmatpush1.msra.mxu0 0.0
    %1265 = vmatprep.subr.mxu0 0.0
    %1266 = vmatpush1.msra.mxu0 0.0
    %1267 = vmatprep.subr.mxu0 0.0
    %1268 = vmatpush1.msra.mxu0 0.0
    %1269 = vmatprep.subr.mxu0 0.0
    %1270 = vmatpush1.msra.mxu0 0.0
    %1271 = vmatprep.subr.mxu0 0.0
    %1272 = vmatpush1.msra.mxu0 0.0
    %1273 = vmatprep.subr.mxu0 0.0
    %1274 = vmatpush1.msra.mxu0 0.0
    %1275 = vmatprep.subr.mxu0 0.0
    %1276 = vmatpush1.msra.mxu0 0.0
    %1277 = vmatprep.subr.mxu0 0.0
    %1278 = vmatpush1.msra.mxu0 0.0
    %1279 = vmatprep.subr.mxu0 0.0
    %1280 = vmatpush1.msra.mxu0 0.0
    %1281 = vmatprep.subr.mxu0 0.0
    %1282 = vmatpush1.msra.mxu0 0.0
    %1283 = vmatprep.subr.mxu0 0.0
    %1284 = vmatpush1.msra.mxu0 0.0
    %1285 = vmatprep.subr.mxu0 0.0
    %1286 = vmatpush1.msra.mxu0 0.0
    %1287 = vmatprep.subr.mxu0 0.0
    %1288 = vmatpush1.msra.mxu0 0.0
    %1289 = vmatprep.subr.mxu0 0.0
    %1290 = vmatpush1.msra.mxu0 0.0
    %1291 = vmatprep.subr.mxu0 0.0
    %1292 = vmatpush1.msra.mxu0 0.0
    %1293 = vmatprep.subr.mxu0 0.0
    %1294 = vmatpush1.msra.mxu0 0.0
    %1295 = vmatprep.subr.mxu0 0.0
    %1296 = vmatpush1.msra.mxu0 0.0
    %1297 = vmatprep.subr.mxu0 0.0
    %1298 = vmatpush1.msra.mxu0 0.0
    %1299 = vmatprep.subr.mxu0 0.0
    %1300 = vmatpush1.msra.mxu0 0.0
    %1301 = vmatprep.subr.mxu0 0.0
    %1302 = vmatpush1.msra.mxu0 0.0
    %1303 = vmatprep.subr.mxu0 0.0
    %1304 = vmatpush1.msra.mxu0 0.0
    %1305 = vmatprep.subr.mxu0 0.0
    %1306 = vmatpush1.msra.mxu0 0.0
    %1307 = vmatprep.subr.mxu0 0.0
    %1308 = vmatpush1.msra.mxu0 0.0
    %1309 = vmatprep.subr.mxu0 0.0
    %1310 = vmatpush1.msra.mxu0 0.0
    %1311 = vmatprep.subr.mxu0 0.0
    %1312 = vmatpush1.msra.mxu0 0.0
    %1313 = vmatprep.subr.mxu0 0.0
    %1314 = vmatpush1.msra.mxu0 0.0
    %1315 = vmatprep.subr.mxu0 0.0
    %1316 = vmatpush1.msra.mxu0 0.0
    %1317 = vmatprep.mubr.f32.mxu0 0.0
    %v1318 = vand.u32 %v1006, 4294901760
    %v1319 = vsub.f32 %v1006, %v1318
    %v1320 = vand.u32 %v1319, 4294901760
    %1321 = vmatmul.mubr.f32.gmra.mrb[0].mxu0 %v1320
    %v1322 = vpop.f32.mrb[0].mxu0
    %v1323 = vadd.f32 %v1247, %v1322
    %v1324 = vpop.f32.mrb[0].mxu0
    %1325 = vdwg.mxu0
    %1326 = vmatprep.subr.mxu0 0.0
    %v1327 = vand.u32 %v27, 4294901760
    %v1328 = vsub.f32 %v27, %v1327
    %v1329 = vand.u32 %v1328, 4294901760
    %1330 = vmatpush1.msra.mxu0 %v1329
    %1331 = vmatprep.subr.mxu0 0.0
    %v1332 = vand.u32 %v28, 4294901760
    %v1333 = vsub.f32 %v28, %v1332
    %v1334 = vand.u32 %v1333, 4294901760
    %1335 = vmatpush1.msra.mxu0 %v1334
    %1336 = vmatprep.subr.mxu0 0.0
    %v1337 = vand.u32 %v44, 4294901760
    %v1338 = vsub.f32 %v44, %v1337
    %v1339 = vand.u32 %v1338, 4294901760
    %1340 = vmatpush1.msra.mxu0 %v1339
    %1341 = vmatprep.subr.mxu0 0.0
    %1342 = vmatpush1.msra.mxu0 0.0
    %1343 = vmatprep.subr.mxu0 0.0
    %1344 = vmatpush1.msra.mxu0 0.0
    %1345 = vmatprep.subr.mxu0 0.0
    %1346 = vmatpush1.msra.mxu0 0.0
    %1347 = vmatprep.subr.mxu0 0.0
    %1348 = vmatpush1.msra.mxu0 0.0
    %1349 = vmatprep.subr.mxu0 0.0
    %1350 = vmatpush1.msra.mxu0 0.0
    %1351 = vmatprep.subr.mxu0 0.0
    %1352 = vmatpush1.msra.mxu0 0.0
    %1353 = vmatprep.subr.mxu0 0.0
    %1354 = vmatpush1.msra.mxu0 0.0
    %1355 = vmatprep.subr.mxu0 0.0
    %1356 = vmatpush1.msra.mxu0 0.0
    %1357 = vmatprep.subr.mxu0 0.0
    %1358 = vmatpush1.msra.mxu0 0.0
    %1359 = vmatprep.subr.mxu0 0.0
    %1360 = vmatpush1.msra.mxu0 0.0
    %1361 = vmatprep.subr.mxu0 0.0
    %1362 = vmatpush1.msra.mxu0 0.0
    %1363 = vmatprep.subr.mxu0 0.0
    %1364 = vmatpush1.msra.mxu0 0.0
    %1365 = vmatprep.subr.mxu0 0.0
    %1366 = vmatpush1.msra.mxu0 0.0
    %1367 = vmatprep.subr.mxu0 0.0
    %1368 = vmatpush1.msra.mxu0 0.0
    %1369 = vmatprep.subr.mxu0 0.0
    %1370 = vmatpush1.msra.mxu0 0.0
    %1371 = vmatprep.subr.mxu0 0.0
    %1372 = vmatpush1.msra.mxu0 0.0
    %1373 = vmatprep.subr.mxu0 0.0
    %1374 = vmatpush1.msra.mxu0 0.0
    %1375 = vmatprep.subr.mxu0 0.0
    %1376 = vmatpush1.msra.mxu0 0.0
    %1377 = vmatprep.subr.mxu0 0.0
    %1378 = vmatpush1.msra.mxu0 0.0
    %1379 = vmatprep.subr.mxu0 0.0
    %1380 = vmatpush1.msra.mxu0 0.0
    %1381 = vmatprep.subr.mxu0 0.0
    %1382 = vmatpush1.msra.mxu0 0.0
    %1383 = vmatprep.subr.mxu0 0.0
    %1384 = vmatpush1.msra.mxu0 0.0
    %1385 = vmatprep.subr.mxu0 0.0
    %1386 = vmatpush1.msra.mxu0 0.0
    %1387 = vmatprep.subr.mxu0 0.0
    %1388 = vmatpush1.msra.mxu0 0.0
    %1389 = vmatprep.subr.mxu0 0.0
    %1390 = vmatpush1.msra.mxu0 0.0
    %1391 = vmatprep.subr.mxu0 0.0
    %1392 = vmatpush1.msra.mxu0 0.0
    %1393 = vmatprep.subr.mxu0 0.0
    %1394 = vmatpush1.msra.mxu0 0.0
    %1395 = vmatprep.subr.mxu0 0.0
    %1396 = vmatpush1.msra.mxu0 0.0
    %1397 = vmatprep.subr.mxu0 0.0
    %1398 = vmatpush1.msra.mxu0 0.0
    %1399 = vmatprep.mubr.f32.mxu0 0.0
    %v1400 = vand.u32 %v1006, 4294901760
    %1401 = vmatmul.mubr.f32.gmra.mrb[0].mxu0 %v1400
    %v1402 = vpop.f32.mrb[0].mxu0
    %v1403 = vadd.f32 %v1323, %v1402
    %v1404 = vpop.f32.mrb[0].mxu0
    %1405 = vdwg.mxu0
    %1406 = vmatprep.subr.mxu0 0.0
    %v1407 = vand.u32 %v27, 4294901760
    %1408 = vmatpush1.msra.mxu0 %v1407
    %1409 = vmatprep.subr.mxu0 0.0
    %v1410 = vand.u32 %v28, 4294901760
    %1411 = vmatpush1.msra.mxu0 %v1410
    %1412 = vmatprep.subr.mxu0 0.0
    %v1413 = vand.u32 %v44, 4294901760
    %1414 = vmatpush1.msra.mxu0 %v1413
    %1415 = vmatprep.subr.mxu0 0.0
    %1416 = vmatpush1.msra.mxu0 0.0
    %1417 = vmatprep.subr.mxu0 0.0
    %1418 = vmatpush1.msra.mxu0 0.0
    %1419 = vmatprep.subr.mxu0 0.0
    %1420 = vmatpush1.msra.mxu0 0.0
    %1421 = vmatprep.subr.mxu0 0.0
    %1422 = vmatpush1.msra.mxu0 0.0
    %1423 = vmatprep.subr.mxu0 0.0
    %1424 = vmatpush1.msra.mxu0 0.0
    %1425 = vmatprep.subr.mxu0 0.0
    %1426 = vmatpush1.msra.mxu0 0.0
    %1427 = vmatprep.subr.mxu0 0.0
    %1428 = vmatpush1.msra.mxu0 0.0
    %1429 = vmatprep.subr.mxu0 0.0
    %1430 = vmatpush1.msra.mxu0 0.0
    %1431 = vmatprep.subr.mxu0 0.0
    %1432 = vmatpush1.msra.mxu0 0.0
    %1433 = vmatprep.subr.mxu0 0.0
    %1434 = vmatpush1.msra.mxu0 0.0
    %1435 = vmatprep.subr.mxu0 0.0
    %1436 = vmatpush1.msra.mxu0 0.0
    %1437 = vmatprep.subr.mxu0 0.0
    %1438 = vmatpush1.msra.mxu0 0.0
    %1439 = vmatprep.subr.mxu0 0.0
    %1440 = vmatpush1.msra.mxu0 0.0
    %1441 = vmatprep.subr.mxu0 0.0
    %1442 = vmatpush1.msra.mxu0 0.0
    %1443 = vmatprep.subr.mxu0 0.0
    %1444 = vmatpush1.msra.mxu0 0.0
    %1445 = vmatprep.subr.mxu0 0.0
    %1446 = vmatpush1.msra.mxu0 0.0
    %1447 = vmatprep.subr.mxu0 0.0
    %1448 = vmatpush1.msra.mxu0 0.0
    %1449 = vmatprep.subr.mxu0 0.0
    %1450 = vmatpush1.msra.mxu0 0.0
    %1451 = vmatprep.subr.mxu0 0.0
    %1452 = vmatpush1.msra.mxu0 0.0
    %1453 = vmatprep.subr.mxu0 0.0
    %1454 = vmatpush1.msra.mxu0 0.0
    %1455 = vmatprep.subr.mxu0 0.0
    %1456 = vmatpush1.msra.mxu0 0.0
    %1457 = vmatprep.subr.mxu0 0.0
    %1458 = vmatpush1.msra.mxu0 0.0
    %1459 = vmatprep.subr.mxu0 0.0
    %1460 = vmatpush1.msra.mxu0 0.0
    %1461 = vmatprep.subr.mxu0 0.0
    %1462 = vmatpush1.msra.mxu0 0.0
    %1463 = vmatprep.subr.mxu0 0.0
    %1464 = vmatpush1.msra.mxu0 0.0
    %1465 = vmatprep.subr.mxu0 0.0
    %1466 = vmatpush1.msra.mxu0 0.0
    %1467 = vmatprep.subr.mxu0 0.0
    %1468 = vmatpush1.msra.mxu0 0.0
    %1469 = vmatprep.subr.mxu0 0.0
    %1470 = vmatpush1.msra.mxu0 0.0
    %1471 = vmatprep.subr.mxu0 0.0
    %1472 = vmatpush1.msra.mxu0 0.0
    %1473 = vmatprep.mubr.f32.mxu0 0.0
    %v1474 = vand.u32 %v1006, 4294901760
    %1475 = vmatmul.mubr.f32.gmra.mrb[0].mxu0 %v1474
    %v1476 = vpop.f32.mrb[0].mxu0
    %v1477 = vadd.f32 %v1403, %v1476
    %v1478 = vpop.f32.mrb[0].mxu0
    %1479 = vdwg.mxu0
    %1480 = vset.pattern.permute.xlu0 3
    %1481 = vperm.xlu0 %1480, %v26
    %v1482 = vpop.permute.xlu0 %1481
    %vm1483 = vcmp.eq.s32.totalorder %v31, %v1482
    %v1484 = vsel %vm1483, 1, 0
    %v1485 = vcvt.s32.f32 %v1484
    %v1487 = vsel %vm38, %v1485, 0
    %1489 = vmatprep.subr.mxu0 0.0
    %v1490 = vand.u32 %v27, 4294901760
    %1491 = vmatpush1.msra.mxu0 %v1490
    %1492 = vmatprep.subr.mxu0 0.0
    %v1493 = vand.u32 %v28, 4294901760
    %1494 = vmatpush1.msra.mxu0 %v1493
    %1495 = vmatprep.subr.mxu0 0.0
    %v1496 = vand.u32 %v44, 4294901760
    %1497 = vmatpush1.msra.mxu0 %v1496
    %1498 = vmatprep.subr.mxu0 0.0
    %1499 = vmatpush1.msra.mxu0 0.0
    %1500 = vmatprep.subr.mxu0 0.0
    %1501 = vmatpush1.msra.mxu0 0.0
    %1502 = vmatprep.subr.mxu0 0.0
    %1503 = vmatpush1.msra.mxu0 0.0
    %1504 = vmatprep.subr.mxu0 0.0
    %1505 = vmatpush1.msra.mxu0 0.0
    %1506 = vmatprep.subr.mxu0 0.0
    %1507 = vmatpush1.msra.mxu0 0.0
    %1508 = vmatprep.subr.mxu0 0.0
    %1509 = vmatpush1.msra.mxu0 0.0
    %1510 = vmatprep.subr.mxu0 0.0
    %1511 = vmatpush1.msra.mxu0 0.0
    %1512 = vmatprep.subr.mxu0 0.0
    %1513 = vmatpush1.msra.mxu0 0.0
    %1514 = vmatprep.subr.mxu0 0.0
    %1515 = vmatpush1.msra.mxu0 0.0
    %1516 = vmatprep.subr.mxu0 0.0
    %1517 = vmatpush1.msra.mxu0 0.0
    %1518 = vmatprep.subr.mxu0 0.0
    %1519 = vmatpush1.msra.mxu0 0.0
    %1520 = vmatprep.subr.mxu0 0.0
    %1521 = vmatpush1.msra.mxu0 0.0
    %1522 = vmatprep.subr.mxu0 0.0
    %1523 = vmatpush1.msra.mxu0 0.0
    %1524 = vmatprep.subr.mxu0 0.0
    %1525 = vmatpush1.msra.mxu0 0.0
    %1526 = vmatprep.subr.mxu0 0.0
    %1527 = vmatpush1.msra.mxu0 0.0
    %1528 = vmatprep.subr.mxu0 0.0
    %1529 = vmatpush1.msra.mxu0 0.0
    %1530 = vmatprep.subr.mxu0 0.0
    %1531 = vmatpush1.msra.mxu0 0.0
    %1532 = vmatprep.subr.mxu0 0.0
    %1533 = vmatpush1.msra.mxu0 0.0
    %1534 = vmatprep.subr.mxu0 0.0
    %1535 = vmatpush1.msra.mxu0 0.0
    %1536 = vmatprep.subr.mxu0 0.0
    %1537 = vmatpush1.msra.mxu0 0.0
    %1538 = vmatprep.subr.mxu0 0.0
    %1539 = vmatpush1.msra.mxu0 0.0
    %1540 = vmatprep.subr.mxu0 0.0
    %1541 = vmatpush1.msra.mxu0 0.0
    %1542 = vmatprep.subr.mxu0 0.0
    %1543 = vmatpush1.msra.mxu0 0.0
    %1544 = vmatprep.subr.mxu0 0.0
    %1545 = vmatpush1.msra.mxu0 0.0
    %1546 = vmatprep.subr.mxu0 0.0
    %1547 = vmatpush1.msra.mxu0 0.0
    %1548 = vmatprep.subr.mxu0 0.0
    %1549 = vmatpush1.msra.mxu0 0.0
    %1550 = vmatprep.subr.mxu0 0.0
    %1551 = vmatpush1.msra.mxu0 0.0
    %1552 = vmatprep.subr.mxu0 0.0
    %1553 = vmatpush1.msra.mxu0 0.0
    %1554 = vmatprep.subr.mxu0 0.0
    %1555 = vmatpush1.msra.mxu0 0.0
    %1556 = vmatprep.mubr.f32.mxu0 0.0
    %v1557 = vand.u32 %v1487, 4294901760
    %v1558 = vsub.f32 %v1487, %v1557
    %v1559 = vand.u32 %v1558, 4294901760
    %v1560 = vsub.f32 %v1558, %v1559
    %v1561 = vand.u32 %v1560, 4294901760
    %1562 = vmatmul.mubr.f32.gmra.mrb[0].mxu0 %v1561
    %v1563 = vpop.f32.mrb[0].mxu0
    %v1564 = vadd.f32 0.0, %v1563
    %v1565 = vpop.f32.mrb[0].mxu0
    %1566 = vdwg.mxu0
    %1567 = vmatprep.subr.mxu0 0.0
    %v1568 = vand.u32 %v27, 4294901760
    %v1569 = vsub.f32 %v27, %v1568
    %v1570 = vand.u32 %v1569, 4294901760
    %v1571 = vsub.f32 %v1569, %v1570
    %v1572 = vand.u32 %v1571, 4294901760
    %1573 = vmatpush1.msra.mxu0 %v1572
    %1574 = vmatprep.subr.mxu0 0.0
    %v1575 = vand.u32 %v28, 4294901760
    %v1576 = vsub.f32 %v28, %v1575
    %v1577 = vand.u32 %v1576, 4294901760
    %v1578 = vsub.f32 %v1576, %v1577
    %v1579 = vand.u32 %v1578, 4294901760
    %1580 = vmatpush1.msra.mxu0 %v1579
    %1581 = vmatprep.subr.mxu0 0.0
    %v1582 = vand.u32 %v44, 4294901760
    %v1583 = vsub.f32 %v44, %v1582
    %v1584 = vand.u32 %v1583, 4294901760
    %v1585 = vsub.f32 %v1583, %v1584
    %v1586 = vand.u32 %v1585, 4294901760
    %1587 = vmatpush1.msra.mxu0 %v1586
    %1588 = vmatprep.subr.mxu0 0.0
    %1589 = vmatpush1.msra.mxu0 0.0
    %1590 = vmatprep.subr.mxu0 0.0
    %1591 = vmatpush1.msra.mxu0 0.0
    %1592 = vmatprep.subr.mxu0 0.0
    %1593 = vmatpush1.msra.mxu0 0.0
    %1594 = vmatprep.subr.mxu0 0.0
    %1595 = vmatpush1.msra.mxu0 0.0
    %1596 = vmatprep.subr.mxu0 0.0
    %1597 = vmatpush1.msra.mxu0 0.0
    %1598 = vmatprep.subr.mxu0 0.0
    %1599 = vmatpush1.msra.mxu0 0.0
    %1600 = vmatprep.subr.mxu0 0.0
    %1601 = vmatpush1.msra.mxu0 0.0
    %1602 = vmatprep.subr.mxu0 0.0
    %1603 = vmatpush1.msra.mxu0 0.0
    %1604 = vmatprep.subr.mxu0 0.0
    %1605 = vmatpush1.msra.mxu0 0.0
    %1606 = vmatprep.subr.mxu0 0.0
    %1607 = vmatpush1.msra.mxu0 0.0
    %1608 = vmatprep.subr.mxu0 0.0
    %1609 = vmatpush1.msra.mxu0 0.0
    %1610 = vmatprep.subr.mxu0 0.0
    %1611 = vmatpush1.msra.mxu0 0.0
    %1612 = vmatprep.subr.mxu0 0.0
    %1613 = vmatpush1.msra.mxu0 0.0
    %1614 = vmatprep.subr.mxu0 0.0
    %1615 = vmatpush1.msra.mxu0 0.0
    %1616 = vmatprep.subr.mxu0 0.0
    %1617 = vmatpush1.msra.mxu0 0.0
    %1618 = vmatprep.subr.mxu0 0.0
    %1619 = vmatpush1.msra.mxu0 0.0
    %1620 = vmatprep.subr.mxu0 0.0
    %1621 = vmatpush1.msra.mxu0 0.0
    %1622 = vmatprep.subr.mxu0 0.0
    %1623 = vmatpush1.msra.mxu0 0.0
    %1624 = vmatprep.subr.mxu0 0.0
    %1625 = vmatpush1.msra.mxu0 0.0
    %1626 = vmatprep.subr.mxu0 0.0
    %1627 = vmatpush1.msra.mxu0 0.0
    %1628 = vmatprep.subr.mxu0 0.0
    %1629 = vmatpush1.msra.mxu0 0.0
    %1630 = vmatprep.subr.mxu0 0.0
    %1631 = vmatpush1.msra.mxu0 0.0
    %1632 = vmatprep.subr.mxu0 0.0
    %1633 = vmatpush1.msra.mxu0 0.0
    %1634 = vmatprep.subr.mxu0 0.0
    %1635 = vmatpush1.msra.mxu0 0.0
    %1636 = vmatprep.subr.mxu0 0.0
    %1637 = vmatpush1.msra.mxu0 0.0
    %1638 = vmatprep.subr.mxu0 0.0
    %1639 = vmatpush1.msra.mxu0 0.0
    %1640 = vmatprep.subr.mxu0 0.0
    %1641 = vmatpush1.msra.mxu0 0.0
    %1642 = vmatprep.subr.mxu0 0.0
    %1643 = vmatpush1.msra.mxu0 0.0
    %1644 = vmatprep.subr.mxu0 0.0
    %1645 = vmatpush1.msra.mxu0 0.0
    %1646 = vmatprep.mubr.f32.mxu0 0.0
    %v1647 = vand.u32 %v1487, 4294901760
    %1648 = vmatmul.mubr.f32.gmra.mrb[0].mxu0 %v1647
    %v1649 = vpop.f32.mrb[0].mxu0
    %v1650 = vadd.f32 %v1564, %v1649
    %v1651 = vpop.f32.mrb[0].mxu0
    %1652 = vdwg.mxu0
    %1653 = vmatprep.subr.mxu0 0.0
    %v1654 = vand.u32 %v27, 4294901760
    %v1655 = vsub.f32 %v27, %v1654
    %1656 = vmatpush1.msra.mxu0 %v1655
    %1657 = vmatprep.subr.mxu0 0.0
    %v1658 = vand.u32 %v28, 4294901760
    %v1659 = vsub.f32 %v28, %v1658
    %1660 = vmatpush1.msra.mxu0 %v1659
    %1661 = vmatprep.subr.mxu0 0.0
    %v1662 = vand.u32 %v44, 4294901760
    %v1663 = vsub.f32 %v44, %v1662
    %1664 = vmatpush1.msra.mxu0 %v1663
    %1665 = vmatprep.subr.mxu0 0.0
    %1666 = vmatpush1.msra.mxu0 0.0
    %1667 = vmatprep.subr.mxu0 0.0
    %1668 = vmatpush1.msra.mxu0 0.0
    %1669 = vmatprep.subr.mxu0 0.0
    %1670 = vmatpush1.msra.mxu0 0.0
    %1671 = vmatprep.subr.mxu0 0.0
    %1672 = vmatpush1.msra.mxu0 0.0
    %1673 = vmatprep.subr.mxu0 0.0
    %1674 = vmatpush1.msra.mxu0 0.0
    %1675 = vmatprep.subr.mxu0 0.0
    %1676 = vmatpush1.msra.mxu0 0.0
    %1677 = vmatprep.subr.mxu0 0.0
    %1678 = vmatpush1.msra.mxu0 0.0
    %1679 = vmatprep.subr.mxu0 0.0
    %1680 = vmatpush1.msra.mxu0 0.0
    %1681 = vmatprep.subr.mxu0 0.0
    %1682 = vmatpush1.msra.mxu0 0.0
    %1683 = vmatprep.subr.mxu0 0.0
    %1684 = vmatpush1.msra.mxu0 0.0
    %1685 = vmatprep.subr.mxu0 0.0
    %1686 = vmatpush1.msra.mxu0 0.0
    %1687 = vmatprep.subr.mxu0 0.0
    %1688 = vmatpush1.msra.mxu0 0.0
    %1689 = vmatprep.subr.mxu0 0.0
    %1690 = vmatpush1.msra.mxu0 0.0
    %1691 = vmatprep.subr.mxu0 0.0
    %1692 = vmatpush1.msra.mxu0 0.0
    %1693 = vmatprep.subr.mxu0 0.0
    %1694 = vmatpush1.msra.mxu0 0.0
    %1695 = vmatprep.subr.mxu0 0.0
    %1696 = vmatpush1.msra.mxu0 0.0
    %1697 = vmatprep.subr.mxu0 0.0
    %1698 = vmatpush1.msra.mxu0 0.0
    %1699 = vmatprep.subr.mxu0 0.0
    %1700 = vmatpush1.msra.mxu0 0.0
    %1701 = vmatprep.subr.mxu0 0.0
    %1702 = vmatpush1.msra.mxu0 0.0
    %1703 = vmatprep.subr.mxu0 0.0
    %1704 = vmatpush1.msra.mxu0 0.0
    %1705 = vmatprep.subr.mxu0 0.0
    %1706 = vmatpush1.msra.mxu0 0.0
    %1707 = vmatprep.subr.mxu0 0.0
    %1708 = vmatpush1.msra.mxu0 0.0
    %1709 = vmatprep.subr.mxu0 0.0
    %1710 = vmatpush1.msra.mxu0 0.0
    %1711 = vmatprep.subr.mxu0 0.0
    %1712 = vmatpush1.msra.mxu0 0.0
    %1713 = vmatprep.subr.mxu0 0.0
    %1714 = vmatpush1.msra.mxu0 0.0
    %1715 = vmatprep.subr.mxu0 0.0
    %1716 = vmatpush1.msra.mxu0 0.0
    %1717 = vmatprep.subr.mxu0 0.0
    %1718 = vmatpush1.msra.mxu0 0.0
    %1719 = vmatprep.subr.mxu0 0.0
    %1720 = vmatpush1.msra.mxu0 0.0
    %1721 = vmatprep.subr.mxu0 0.0
    %1722 = vmatpush1.msra.mxu0 0.0
    %1723 = vmatprep.mubr.f32.mxu0 0.0
    %v1724 = vand.u32 %v1487, 4294901760
    %v1725 = vsub.f32 %v1487, %v1724
    %1726 = vmatmul.mubr.f32.gmra.mrb[0].mxu0 %v1725
    %v1727 = vpop.f32.mrb[0].mxu0
    %v1728 = vadd.f32 %v1650, %v1727
    %v1729 = vpop.f32.mrb[0].mxu0
    %1730 = vdwg.mxu0
    %1731 = vmatprep.subr.mxu0 0.0
    %v1732 = vand.u32 %v27, 4294901760
    %1733 = vmatpush1.msra.mxu0 %v1732
    %1734 = vmatprep.subr.mxu0 0.0
    %v1735 = vand.u32 %v28, 4294901760
    %1736 = vmatpush1.msra.mxu0 %v1735
    %1737 = vmatprep.subr.mxu0 0.0
    %v1738 = vand.u32 %v44, 4294901760
    %1739 = vmatpush1.msra.mxu0 %v1738
    %1740 = vmatprep.subr.mxu0 0.0
    %1741 = vmatpush1.msra.mxu0 0.0
    %1742 = vmatprep.subr.mxu0 0.0
    %1743 = vmatpush1.msra.mxu0 0.0
    %1744 = vmatprep.subr.mxu0 0.0
    %1745 = vmatpush1.msra.mxu0 0.0
    %1746 = vmatprep.subr.mxu0 0.0
    %1747 = vmatpush1.msra.mxu0 0.0
    %1748 = vmatprep.subr.mxu0 0.0
    %1749 = vmatpush1.msra.mxu0 0.0
    %1750 = vmatprep.subr.mxu0 0.0
    %1751 = vmatpush1.msra.mxu0 0.0
    %1752 = vmatprep.subr.mxu0 0.0
    %1753 = vmatpush1.msra.mxu0 0.0
    %1754 = vmatprep.subr.mxu0 0.0
    %1755 = vmatpush1.msra.mxu0 0.0
    %1756 = vmatprep.subr.mxu0 0.0
    %1757 = vmatpush1.msra.mxu0 0.0
    %1758 = vmatprep.subr.mxu0 0.0
    %1759 = vmatpush1.msra.mxu0 0.0
    %1760 = vmatprep.subr.mxu0 0.0
    %1761 = vmatpush1.msra.mxu0 0.0
    %1762 = vmatprep.subr.mxu0 0.0
    %1763 = vmatpush1.msra.mxu0 0.0
    %1764 = vmatprep.subr.mxu0 0.0
    %1765 = vmatpush1.msra.mxu0 0.0
    %1766 = vmatprep.subr.mxu0 0.0
    %1767 = vmatpush1.msra.mxu0 0.0
    %1768 = vmatprep.subr.mxu0 0.0
    %1769 = vmatpush1.msra.mxu0 0.0
    %1770 = vmatprep.subr.mxu0 0.0
    %1771 = vmatpush1.msra.mxu0 0.0
    %1772 = vmatprep.subr.mxu0 0.0
    %1773 = vmatpush1.msra.mxu0 0.0
    %1774 = vmatprep.subr.mxu0 0.0
    %1775 = vmatpush1.msra.mxu0 0.0
    %1776 = vmatprep.subr.mxu0 0.0
    %1777 = vmatpush1.msra.mxu0 0.0
    %1778 = vmatprep.subr.mxu0 0.0
    %1779 = vmatpush1.msra.mxu0 0.0
    %1780 = vmatprep.subr.mxu0 0.0
    %1781 = vmatpush1.msra.mxu0 0.0
    %1782 = vmatprep.subr.mxu0 0.0
    %1783 = vmatpush1.msra.mxu0 0.0
    %1784 = vmatprep.subr.mxu0 0.0
    %1785 = vmatpush1.msra.mxu0 0.0
    %1786 = vmatprep.subr.mxu0 0.0
    %1787 = vmatpush1.msra.mxu0 0.0
    %1788 = vmatprep.subr.mxu0 0.0
    %1789 = vmatpush1.msra.mxu0 0.0
    %1790 = vmatprep.subr.mxu0 0.0
    %1791 = vmatpush1.msra.mxu0 0.0
    %1792 = vmatprep.subr.mxu0 0.0
    %1793 = vmatpush1.msra.mxu0 0.0
    %1794 = vmatprep.subr.mxu0 0.0
    %1795 = vmatpush1.msra.mxu0 0.0
    %1796 = vmatprep.subr.mxu0 0.0
    %1797 = vmatpush1.msra.mxu0 0.0
    %1798 = vmatprep.mubr.f32.mxu0 0.0
    %v1799 = vand.u32 %v1487, 4294901760
    %v1800 = vsub.f32 %v1487, %v1799
    %v1801 = vand.u32 %v1800, 4294901760
    %1802 = vmatmul.mubr.f32.gmra.mrb[0].mxu0 %v1801
    %v1803 = vpop.f32.mrb[0].mxu0
    %v1804 = vadd.f32 %v1728, %v1803
    %v1805 = vpop.f32.mrb[0].mxu0
    %1806 = vdwg.mxu0
    %1807 = vmatprep.subr.mxu0 0.0
    %v1808 = vand.u32 %v27, 4294901760
    %v1809 = vsub.f32 %v27, %v1808
    %v1810 = vand.u32 %v1809, 4294901760
    %1811 = vmatpush1.msra.mxu0 %v1810
    %1812 = vmatprep.subr.mxu0 0.0
    %v1813 = vand.u32 %v28, 4294901760
    %v1814 = vsub.f32 %v28, %v1813
    %v1815 = vand.u32 %v1814, 4294901760
    %1816 = vmatpush1.msra.mxu0 %v1815
    %1817 = vmatprep.subr.mxu0 0.0
    %v1818 = vand.u32 %v44, 4294901760
    %v1819 = vsub.f32 %v44, %v1818
    %v1820 = vand.u32 %v1819, 4294901760
    %1821 = vmatpush1.msra.mxu0 %v1820
    %1822 = vmatprep.subr.mxu0 0.0
    %1823 = vmatpush1.msra.mxu0 0.0
    %1824 = vmatprep.subr.mxu0 0.0
    %1825 = vmatpush1.msra.mxu0 0.0
    %1826 = vmatprep.subr.mxu0 0.0
    %1827 = vmatpush1.msra.mxu0 0.0
    %1828 = vmatprep.subr.mxu0 0.0
    %1829 = vmatpush1.msra.mxu0 0.0
    %1830 = vmatprep.subr.mxu0 0.0
    %1831 = vmatpush1.msra.mxu0 0.0
    %1832 = vmatprep.subr.mxu0 0.0
    %1833 = vmatpush1.msra.mxu0 0.0
    %1834 = vmatprep.subr.mxu0 0.0
    %1835 = vmatpush1.msra.mxu0 0.0
    %1836 = vmatprep.subr.mxu0 0.0
    %1837 = vmatpush1.msra.mxu0 0.0
    %1838 = vmatprep.subr.mxu0 0.0
    %1839 = vmatpush1.msra.mxu0 0.0
    %1840 = vmatprep.subr.mxu0 0.0
    %1841 = vmatpush1.msra.mxu0 0.0
    %1842 = vmatprep.subr.mxu0 0.0
    %1843 = vmatpush1.msra.mxu0 0.0
    %1844 = vmatprep.subr.mxu0 0.0
    %1845 = vmatpush1.msra.mxu0 0.0
    %1846 = vmatprep.subr.mxu0 0.0
    %1847 = vmatpush1.msra.mxu0 0.0
    %1848 = vmatprep.subr.mxu0 0.0
    %1849 = vmatpush1.msra.mxu0 0.0
    %1850 = vmatprep.subr.mxu0 0.0
    %1851 = vmatpush1.msra.mxu0 0.0
    %1852 = vmatprep.subr.mxu0 0.0
    %1853 = vmatpush1.msra.mxu0 0.0
    %1854 = vmatprep.subr.mxu0 0.0
    %1855 = vmatpush1.msra.mxu0 0.0
    %1856 = vmatprep.subr.mxu0 0.0
    %1857 = vmatpush1.msra.mxu0 0.0
    %1858 = vmatprep.subr.mxu0 0.0
    %1859 = vmatpush1.msra.mxu0 0.0
    %1860 = vmatprep.subr.mxu0 0.0
    %1861 = vmatpush1.msra.mxu0 0.0
    %1862 = vmatprep.subr.mxu0 0.0
    %1863 = vmatpush1.msra.mxu0 0.0
    %1864 = vmatprep.subr.mxu0 0.0
    %1865 = vmatpush1.msra.mxu0 0.0
    %1866 = vmatprep.subr.mxu0 0.0
    %1867 = vmatpush1.msra.mxu0 0.0
    %1868 = vmatprep.subr.mxu0 0.0
    %1869 = vmatpush1.msra.mxu0 0.0
    %1870 = vmatprep.subr.mxu0 0.0
    %1871 = vmatpush1.msra.mxu0 0.0
    %1872 = vmatprep.subr.mxu0 0.0
    %1873 = vmatpush1.msra.mxu0 0.0
    %1874 = vmatprep.subr.mxu0 0.0
    %1875 = vmatpush1.msra.mxu0 0.0
    %1876 = vmatprep.subr.mxu0 0.0
    %1877 = vmatpush1.msra.mxu0 0.0
    %1878 = vmatprep.subr.mxu0 0.0
    %1879 = vmatpush1.msra.mxu0 0.0
    %1880 = vmatprep.mubr.f32.mxu0 0.0
    %v1881 = vand.u32 %v1487, 4294901760
    %1882 = vmatmul.mubr.f32.gmra.mrb[0].mxu0 %v1881
    %v1883 = vpop.f32.mrb[0].mxu0
    %v1884 = vadd.f32 %v1804, %v1883
    %v1885 = vpop.f32.mrb[0].mxu0
    %1886 = vdwg.mxu0
    %1887 = vmatprep.subr.mxu0 0.0
    %v1888 = vand.u32 %v27, 4294901760
    %1889 = vmatpush1.msra.mxu0 %v1888
    %1890 = vmatprep.subr.mxu0 0.0
    %v1891 = vand.u32 %v28, 4294901760
    %1892 = vmatpush1.msra.mxu0 %v1891
    %1893 = vmatprep.subr.mxu0 0.0
    %v1894 = vand.u32 %v44, 4294901760
    %1895 = vmatpush1.msra.mxu0 %v1894
    %1896 = vmatprep.subr.mxu0 0.0
    %1897 = vmatpush1.msra.mxu0 0.0
    %1898 = vmatprep.subr.mxu0 0.0
    %1899 = vmatpush1.msra.mxu0 0.0
    %1900 = vmatprep.subr.mxu0 0.0
    %1901 = vmatpush1.msra.mxu0 0.0
    %1902 = vmatprep.subr.mxu0 0.0
    %1903 = vmatpush1.msra.mxu0 0.0
    %1904 = vmatprep.subr.mxu0 0.0
    %1905 = vmatpush1.msra.mxu0 0.0
    %1906 = vmatprep.subr.mxu0 0.0
    %1907 = vmatpush1.msra.mxu0 0.0
    %1908 = vmatprep.subr.mxu0 0.0
    %1909 = vmatpush1.msra.mxu0 0.0
    %1910 = vmatprep.subr.mxu0 0.0
    %1911 = vmatpush1.msra.mxu0 0.0
    %1912 = vmatprep.subr.mxu0 0.0
    %1913 = vmatpush1.msra.mxu0 0.0
    %1914 = vmatprep.subr.mxu0 0.0
    %1915 = vmatpush1.msra.mxu0 0.0
    %1916 = vmatprep.subr.mxu0 0.0
    %1917 = vmatpush1.msra.mxu0 0.0
    %1918 = vmatprep.subr.mxu0 0.0
    %1919 = vmatpush1.msra.mxu0 0.0
    %1920 = vmatprep.subr.mxu0 0.0
    %1921 = vmatpush1.msra.mxu0 0.0
    %1922 = vmatprep.subr.mxu0 0.0
    %1923 = vmatpush1.msra.mxu0 0.0
    %1924 = vmatprep.subr.mxu0 0.0
    %1925 = vmatpush1.msra.mxu0 0.0
    %1926 = vmatprep.subr.mxu0 0.0
    %1927 = vmatpush1.msra.mxu0 0.0
    %1928 = vmatprep.subr.mxu0 0.0
    %1929 = vmatpush1.msra.mxu0 0.0
    %1930 = vmatprep.subr.mxu0 0.0
    %1931 = vmatpush1.msra.mxu0 0.0
    %1932 = vmatprep.subr.mxu0 0.0
    %1933 = vmatpush1.msra.mxu0 0.0
    %1934 = vmatprep.subr.mxu0 0.0
    %1935 = vmatpush1.msra.mxu0 0.0
    %1936 = vmatprep.subr.mxu0 0.0
    %1937 = vmatpush1.msra.mxu0 0.0
    %1938 = vmatprep.subr.mxu0 0.0
    %1939 = vmatpush1.msra.mxu0 0.0
    %1940 = vmatprep.subr.mxu0 0.0
    %1941 = vmatpush1.msra.mxu0 0.0
    %1942 = vmatprep.subr.mxu0 0.0
    %1943 = vmatpush1.msra.mxu0 0.0
    %1944 = vmatprep.subr.mxu0 0.0
    %1945 = vmatpush1.msra.mxu0 0.0
    %1946 = vmatprep.subr.mxu0 0.0
    %1947 = vmatpush1.msra.mxu0 0.0
    %1948 = vmatprep.subr.mxu0 0.0
    %1949 = vmatpush1.msra.mxu0 0.0
    %1950 = vmatprep.subr.mxu0 0.0
    %1951 = vmatpush1.msra.mxu0 0.0
    %1952 = vmatprep.subr.mxu0 0.0
    %1953 = vmatpush1.msra.mxu0 0.0
    %1954 = vmatprep.mubr.f32.mxu0 0.0
    %v1955 = vand.u32 %v1487, 4294901760
    %1956 = vmatmul.mubr.f32.gmra.mrb[0].mxu0 %v1955
    %v1957 = vpop.f32.mrb[0].mxu0
    %v1958 = vadd.f32 %v1884, %v1957
    %v1959 = vpop.f32.mrb[0].mxu0
    %1960 = vdwg.mxu0
    %1962 = vrot.lane.b32.xlu0 %v996, 32
    %v1963 = vpop.permute.xlu0 %1962
    %1966 = vrot.lane.b32.xlu0 %v1477, 64
    %v1967 = vpop.permute.xlu0 %1966
    %1970 = vrot.lane.b32.xlu0 %v1958, 96
    %v1971 = vpop.permute.xlu0 %1970
    %vm1973 = vcmask 261120
    %v1974 = vsel %vm1973, %v515, %v1963
    %vm1975 = vcmask 523264
    %v1976 = vsel %vm1975, %v1974, %v1967
    %vm1977 = vcmask 785408
    %v1978 = vsel %vm1977, %v1976, %v1971
    %1979 = vst [vmem:[#allocation5] sm:$0xff] %v1978
    // Predicated region
    $region14: #{tpu_custom_call.1} parent=1 // pred_check
      _
    $region15: #{tpu_custom_call.1} parent=1 // pred_check_branch
      %1981 = sbr.rel (0) target = $region17
    $region16: #{tpu_custom_call.1} parent=1 // pred_region
      %s1983 = ssub.s32 128, 128
      %1984 = vsyncadd [#allocation4], %s1983
      %s1986 = sshll.u32 [#allocation5], 4
      %s1987 = int_to_ptr.vmem [resolvable:$true] %s1986
      %1989 = dma.vmem_to_hbm [thread:$0]  %s1987, 128, %s2, [#allocation4]
    $region17: #{tpu_custom_call.1} parent=1 // pred_fallthru
      _
    // Predicated region
    $region18: #{tpu_custom_call.1} parent=1 // pred_check
      _
    $region19: #{tpu_custom_call.1} parent=1 // pred_check_branch
      %1991 = sbr.rel (0) target = $region21
    $region20: #{tpu_custom_call.1} parent=1 // pred_region
      %1992 = dma.done [#allocation4], 128
    $region21: #{tpu_custom_call.1} parent=1 // pred_fallthru
      _
    %1993 = vsyncpa [#allocation3], 1
    %1994 = vsyncpa [#allocation4], 1

</llo_original>
